<compile_context>
chip_gen: v6e
topology: v6e:2x2x1
jax: 0.10.0
libtpu: 0.0.40
codegen_flags: <defaults>
</compile_context>

<pallas_src>
import numpy as np
import jax
import jax.numpy as jnp
from jax import lax
from jax.experimental import pallas as pl
from jax.experimental.pallas import tpu as pltpu

NUM_VERTS   = 512
NUM_JOINTS  = 24
NUM_JNT_OUT = 25                      # smpl_output.joints -> [B, 25, 3]
NUM_BETAS   = 10
NUM_POSE    = 9 * (NUM_JOINTS - 1)    # 207 pose-blendshape features
NUM_FEATS   = NUM_BETAS + NUM_POSE    # 217 fused blendshape features
FEAT_PAD    = 256                     # zero-padded K for full MXU passes
TB          = 8                       # batch rows per grid step (one sublane tile)

# standard SMPL kinematic tree (structure, not checkpoint data)
SMPL_PARENTS = np.array(
    [-1, 0, 0, 0, 1, 2, 3, 4, 5, 6, 7, 8, 9, 9, 9, 12, 13, 14, 16, 17, 18,
     19, 20, 21], dtype=np.int64)


# ---------------------------------------------------------------------------
# Pallas kernel: per-vertex LBS + scale/transl + output-joint regression.
# All vertex-indexed data is lane-dense: [feature, V].  TB batch rows / step.
# ---------------------------------------------------------------------------
def _lbs_kernel(vt_ref, dirs_ref, w_ref, jreg_ref,      # model (constant blocks)
                feat_ref, At_ref, st_ref,               # per-batch-tile operands
                verts_ref, joints_ref):                 # outputs (3, TB, V/25)
    V = w_ref.shape[1]

    # fused shape+pose blendshapes: (TB, 256) @ (256, 3V) -> (TB, 3V) f32 acc.
    offs = jnp.dot(feat_ref[...], dirs_ref[...],
                   preferred_element_type=jnp.float32)
    v_posed = vt_ref[...] + offs                         # (TB, 3V)
    x = v_posed[:, 0 * V:1 * V]
    y = v_posed[:, 1 * V:2 * V]
    z = v_posed[:, 2 * V:3 * V]

    # skinning transforms, lane-dense: (16*TB, 24) @ (24, V) -> (16*TB, V).
    # Row layout is k-major / batch-minor, so rows [k*TB:(k+1)*TB] are the
    # k-th 4x4 entry for all TB batch rows (contiguous sublane slab).
    A2 = At_ref[...].reshape(16 * TB, NUM_JOINTS)
    T = jnp.dot(A2, w_ref[...], preferred_element_type=jnp.float32)

    def trow(k):
        return T[k * TB:(k + 1) * TB]                    # (TB, V)

    px = trow(0) * x + trow(1) * y + trow(2) * z + trow(3)
    py = trow(4) * x + trow(5) * y + trow(6) * z + trow(7)
    pz = trow(8) * x + trow(9) * y + trow(10) * z + trow(11)

    sc = st_ref[:, 0:1]                                  # scale          (TB, 1)
    tx = st_ref[:, 1:2]                                  # transl*scale x (TB, 1)
    ty = st_ref[:, 2:3]
    tz = st_ref[:, 3:4]

    # dense (TB, V) slab stores -- output layout is (3, TB, V).
    verts_ref[0] = px * sc + tx
    verts_ref[1] = py * sc + ty
    verts_ref[2] = pz * sc + tz

    # output-joint regression from posed vertices:
    # (3*TB, V) contracted against lane-dense (25, V) -> (3*TB, 25)
    pcat = jnp.concatenate([px, py, pz], axis=0).astype(jreg_ref.dtype)
    jnt = lax.dot_general(pcat, jreg_ref[...],
                          (((1,), (1,)), ((), ())),
                          preferred_element_type=jnp.float32)
    joints_ref[0] = jnt[0 * TB:1 * TB] * sc + tx
    joints_ref[1] = jnt[1 * TB:2 * TB] * sc + ty
    joints_ref[2] = jnt[2 * TB:3 * TB] * sc + tz


def lbs_pallas(model, feats, A_kb, st):
    """Run the LBS kernel on padded batch B_pad (multiple of TB).

    Returns verts (3, B_pad, V) and joints (3, B_pad, 25), both f32.
    """
    B_pad = feats.shape[0]
    V = model['w_t'].shape[1]
    n_steps = B_pad // TB

    flops = 2 * B_pad * (FEAT_PAD * 3 * V + 16 * NUM_JOINTS * V
                         + 3 * V * NUM_JNT_OUT)
    bytes_accessed = (
        model['dirs_t'].size * 2 + model['w_t'].size * 2
        + model['jreg_ld'].size * 2 + model['vt_flat'].size * 4
        + feats.size * 2 + A_kb.size * 2 + st.size * 4
        + B_pad * 3 * V * 4 + B_pad * 3 * NUM_JNT_OUT * 4)

    grid_spec = pltpu.PrefetchScalarGridSpec(
        num_scalar_prefetch=0,
        grid=(n_steps,),
        in_specs=[
            # vertex-indexed model tensors: constant block index => fetched
            # once and kept resident across the batch grid axis.
            pl.BlockSpec((1, 3 * V), lambda i: (0, 0)),               # vt_flat f32
            pl.BlockSpec((FEAT_PAD, 3 * V), lambda i: (0, 0)),        # dirs_t bf16
            pl.BlockSpec((NUM_JOINTS, V), lambda i: (0, 0)),          # lbs W^T bf16
            pl.BlockSpec((NUM_JNT_OUT, V), lambda i: (0, 0)),         # J_ext bf16 (lane-dense)
            # per-batch-tile operands
            pl.BlockSpec((TB, FEAT_PAD), lambda i: (i, 0)),           # [betas|pose] bf16
            pl.BlockSpec((16, TB, NUM_JOINTS), lambda i: (0, i, 0)),  # A entries bf16
            pl.BlockSpec((TB, 4), lambda i: (i, 0)),                  # [scale, transl*scale] f32
        ],
        out_specs=[
            pl.BlockSpec((3, TB, V), lambda i: (0, i, 0)),            # verts (lane-dense)
            pl.BlockSpec((3, TB, NUM_JNT_OUT), lambda i: (0, i, 0)),  # joints
        ],
    )

    verts_t, joints_t = pl.pallas_call(
        _lbs_kernel,
        out_shape=(
            jax.ShapeDtypeStruct((3, B_pad, V), jnp.float32),
            jax.ShapeDtypeStruct((3, B_pad, NUM_JNT_OUT), jnp.float32),
        ),
        grid_spec=grid_spec,
        compiler_params=pltpu.CompilerParams(
            dimension_semantics=("parallel",),
            vmem_limit_bytes=32 * 1024 * 1024),
        cost_estimate=pl.CostEstimate(flops=flops, transcendentals=0,
                                      bytes_accessed=bytes_accessed),
    )(model['vt_flat'], model['dirs_t'], model['w_t'], model['jreg_ld'],
      feats, A_kb, st)

    return verts_t, joints_t


# ---------------------------------------------------------------------------
# Plain-JAX glue (small / sequential pieces of SMPL)
# ---------------------------------------------------------------------------
def batch_rodrigues(rot_vecs):
    angle = jnp.linalg.norm(rot_vecs + 1e-8, axis=-1, keepdims=True)
    rot_dir = rot_vecs / angle
    cos = jnp.cos(angle)[..., None]
    sin = jnp.sin(angle)[..., None]
    rx, ry, rz = rot_dir[:, 0], rot_dir[:, 1], rot_dir[:, 2]
    zeros = jnp.zeros_like(rx)
    K = jnp.stack([zeros, -rz, ry, rz, zeros, -rx, -ry, rx, zeros],
                  axis=-1).reshape(-1, 3, 3)
    ident = jnp.eye(3, dtype=rot_vecs.dtype)[None]
    return ident + sin * K + (1.0 - cos) * jnp.matmul(K, K)


def batch_rigid_transform(rot_mats, joints, parents):
    B, K = joints.shape[:2]
    rel_joints = joints.at[:, 1:].add(-joints[:, parents[1:]])
    top = jnp.concatenate([rot_mats, rel_joints[..., None]], axis=-1)  # (B,K,3,4)
    bottom = jnp.broadcast_to(
        jnp.array([0.0, 0.0, 0.0, 1.0], rot_mats.dtype), (B, K, 1, 4))
    tmats = jnp.concatenate([top, bottom], axis=2)                     # (B,K,4,4)
    chain = [tmats[:, 0]]
    for i in range(1, K):
        chain.append(jnp.matmul(chain[parents[i]], tmats[:, i]))
    transforms = jnp.stack(chain, axis=1)
    joints_hom = jnp.concatenate(
        [joints, jnp.zeros((B, K, 1), joints.dtype)], axis=-1)
    tj = jnp.einsum('bkij,bkj->bki', transforms, joints_hom)
    return transforms.at[:, :, :, 3].add(-tj)                         # A: (B,K,4,4)


def make_synthetic_smpl(key):
    ks = jax.random.split(key, 6)
    v_template = 0.5 * jax.random.normal(ks[0], (NUM_VERTS, 3), jnp.float32)
    shapedirs = 0.03 * jax.random.normal(ks[1], (NUM_VERTS, 3, NUM_BETAS),
                                         jnp.float32)
    posedirs = 0.01 * jax.random.normal(ks[2], (NUM_VERTS, 3, NUM_POSE),
                                        jnp.float32)
    J_regressor = jax.nn.softmax(
        jax.random.normal(ks[3], (NUM_JOINTS, NUM_VERTS), jnp.float32), axis=-1)
    lbs_weights = jax.nn.softmax(
        4.0 * jax.random.normal(ks[4], (NUM_VERTS, NUM_JOINTS), jnp.float32),
        axis=-1)
    J_ext = jax.nn.softmax(
        jax.random.normal(ks[5], (NUM_JNT_OUT, NUM_VERTS), jnp.float32), axis=-1)

    # kernel layouts: lane-dense [feature, V]; fused bf16 blendshape matrix
    # dirs_t[p, c*V + v] = concat(shapedirs, posedirs)[v, c, p]; rows zero-
    # padded 217 -> 256 so every MXU pass is full.
    dirs_cat = jnp.concatenate([shapedirs, posedirs], axis=2)       # (V, 3, 217)
    dirs_t = jnp.transpose(dirs_cat, (2, 1, 0)).reshape(NUM_FEATS, 3 * NUM_VERTS)
    dirs_t = jnp.pad(dirs_t, ((0, FEAT_PAD - NUM_FEATS), (0, 0)))

    return dict(
        v_template=v_template,
        vt_flat=jnp.transpose(v_template).reshape(1, 3 * NUM_VERTS),
        shapedirs=shapedirs,
        posedirs=posedirs,
        dirs_t=dirs_t.astype(jnp.bfloat16),
        J_regressor=J_regressor,
        lbs_weights=lbs_weights,
        w_t=jnp.transpose(lbs_weights).astype(jnp.bfloat16),    # (24, V) bf16
        J_ext=J_ext,
        jreg_ld=J_ext.astype(jnp.bfloat16),                     # (25, V) lane-dense bf16
        parents=SMPL_PARENTS,
    )


def smpl_forward_core(model, scale, transl, thetas, betas, use_kernel=True):
    """Synthetic SMPL LBS forward (transl applied after, like SMPLServer)."""
    B = scale.shape[0]
    rot_mats = batch_rodrigues(thetas.reshape(-1, 3)).reshape(B, NUM_JOINTS, 3, 3)
    v_shaped = model['v_template'][None] + jnp.einsum(
        'vci,bi->bvc', model['shapedirs'], betas)
    J = jnp.einsum('jv,bvc->bjc', model['J_regressor'], v_shaped)
    pose_feature = (rot_mats[:, 1:] - jnp.eye(3, dtype=jnp.float32)
                    ).reshape(B, NUM_POSE)
    A = batch_rigid_transform(rot_mats, J, model['parents'])   # (B,24,4,4)

    if use_kernel:
        B_pad = -(-B // TB) * TB
        # fused [betas | pose] features, zero-padded to (B_pad, FEAT_PAD)
        feats = jnp.concatenate([betas, pose_feature], axis=1)          # (B, 217)
        feats = jnp.pad(feats, ((0, B_pad - B), (0, FEAT_PAD - NUM_FEATS)))
        feats = feats.astype(jnp.bfloat16)
        # A entries laid out (16, B_pad, 24): k-major so the skinning matmul
        # output rows group by 4x4-entry, contiguous per batch tile.
        A_kb = jnp.transpose(A.reshape(B, NUM_JOINTS, 16), (2, 0, 1))   # (16, B, 24)
        A_kb = jnp.pad(A_kb, ((0, 0), (0, B_pad - B), (0, 0)))
        A_kb = A_kb.astype(jnp.bfloat16)
        # per-row scalars: [scale, transl*scale]
        st = jnp.concatenate([scale, transl * scale], axis=-1)          # (B, 4)
        st = jnp.pad(st, ((0, B_pad - B), (0, 0)))
        verts_t, joints_t = lbs_pallas(model, feats, A_kb, st)
        verts = jnp.transpose(verts_t, (1, 2, 0))[:B]                   # (B, V, 3)
        joints = jnp.transpose(joints_t, (1, 2, 0))[:B]                 # (B, 25, 3)
    else:
        # pure-JAX reference of the kernel body (for verification only)
        hp = jax.lax.Precision.HIGHEST
        v_posed = v_shaped + jnp.einsum('vcp,bp->bvc', model['posedirs'],
                                        pose_feature, precision=hp)
        T = jnp.einsum('vj,bjmn->bvmn', model['lbs_weights'], A, precision=hp)
        pv = jnp.einsum('bvij,bvj->bvi', T[:, :, :3, :3], v_posed,
                        precision=hp) + T[:, :, :3, 3]
        verts = pv * scale[:, None] + transl[:, None] * scale[:, None]
        joints = jnp.einsum('jv,bvc->bjc', model['J_ext'], pv, precision=hp)
        joints = joints * scale[:, None] + transl[:, None] * scale[:, None]
    return verts, joints, A


class SMPLServerJAX:
    """JAX/Pallas re-implementation of SMPLServer.forward semantics."""

    def __init__(self, key, gender='neutral', betas=None, v_template=None,
                 scale=1.0):
        self.model = make_synthetic_smpl(key)
        self.bone_parents = SMPL_PARENTS.copy()
        self.bone_parents[0] = -1
        self.bone_ids = [[int(self.bone_parents[i]), i]
                         for i in range(NUM_JOINTS)]
        # TODO(synk): self.faces would come from the SMPL asset file.

        self.v_template_given = v_template is not None
        if self.v_template_given:
            vt = jnp.asarray(v_template, jnp.float32)
            self.model = dict(self.model)
            self.model['v_template'] = vt
            self.model['vt_flat'] = jnp.transpose(vt).reshape(1, 3 * NUM_VERTS)
        self.betas = None if betas is None else jnp.asarray(betas, jnp.float32)

        param_canonical = np.zeros((1, 86), np.float32)
        param_canonical[0, 0] = 1.0
        param_canonical[0, 9] = np.pi / 6
        param_canonical[0, 12] = -np.pi / 6
        if self.betas is not None and not self.v_template_given:
            param_canonical[0, -10:] = np.asarray(self.betas)
        self.param_canonical = jnp.asarray(param_canonical)

        sc, tr, th, be = jnp.split(self.param_canonical, [1, 4, 76], axis=1)
        out = self.forward(sc, tr, th, be, absolute=True)
        self.verts_c = out['smpl_verts']
        self.joints_c = out['smpl_jnts']
        self.tfs_c_inv = jnp.linalg.inv(out['smpl_tfs'][0])   # (24,4,4)

    def forward(self, scale, transl, thetas, betas, absolute=False,
                use_kernel=True):
        if self.v_template_given:
            betas = jnp.zeros_like(betas)
        verts, joints, A = smpl_forward_core(
            self.model, scale, transl, thetas, betas, use_kernel=use_kernel)

        out = {'smpl_verts': verts, 'smpl_jnts': joints,
               'smpl_weights': self.model['lbs_weights']}

        tf = A[:, :, :3, :]                                   # (B,24,3,4)
        tf = tf.at[:, :, :3, 3].add(transl[:, None, :])
        tf = tf * scale[:, :, None, None]                     # [B,1,1,1]
        last_row = jnp.broadcast_to(
            jnp.array([0.0, 0.0, 0.0, 1.0], jnp.float32),
            (tf.shape[0], tf.shape[1], 1, 4))
        tf = jnp.concatenate([tf, last_row], axis=2)          # (B,24,4,4)
        if not absolute:
            tf = jnp.einsum('bnij,njk->bnik', tf, self.tfs_c_inv)
        out['smpl_tfs'] = tf
        return out


if __name__ == "__main__":
    key = jax.random.PRNGKey(0)
    k_model, k_param = jax.random.split(key)

    server = SMPLServerJAX(k_model)

    B = 2
    params = 0.2 * jax.random.normal(k_param, (B, 86), jnp.float32)
    scale = jnp.abs(params[:, 0:1]) + 0.8        # [B, 1]
    transl = params[:, 1:4]                      # [B, 3]
    thetas = params[:, 4:76]                     # [B, 72]
    betas = params[:, 76:86]                     # [B, 10]

    out = server.forward(scale, transl, thetas, betas, absolute=False)
    jax.block_until_ready(out)

    assert out['smpl_verts'].shape == (B, NUM_VERTS, 3)
    assert out['smpl_jnts'].shape == (B, NUM_JNT_OUT, 3)
    assert out['smpl_tfs'].shape == (B, NUM_JOINTS, 4, 4)
    assert out['smpl_weights'].shape == (NUM_VERTS, NUM_JOINTS)

    # consistency check vs pure-JAX f32 reference of the kernel compute
    ref = server.forward(scale, transl, thetas, betas, absolute=False,
                         use_kernel=False)
    np.testing.assert_allclose(np.asarray(out['smpl_verts']),
                               np.asarray(ref['smpl_verts']),
                               rtol=2e-2, atol=2e-2)
    np.testing.assert_allclose(np.asarray(out['smpl_jnts']),
                               np.asarray(ref['smpl_jnts']),
                               rtol=2e-2, atol=2e-2)

    print("KERNEL_OK")
</pallas_src>

<mosaic_0001>
module attributes {stable_mosaic.version = 11 : i64} {
  func.func @_lbs_kernel(%arg0: i32, %arg1: memref<1x1536xf32, #tpu.memory_space<vmem>>, %arg2: memref<256x1536xbf16, #tpu.memory_space<vmem>>, %arg3: memref<24x512xbf16, #tpu.memory_space<vmem>>, %arg4: memref<25x512xbf16, #tpu.memory_space<vmem>>, %arg5: memref<8x256xbf16, #tpu.memory_space<vmem>>, %arg6: memref<16x8x24xbf16, #tpu.memory_space<vmem>>, %arg7: memref<8x4xf32, #tpu.memory_space<vmem>>, %arg8: memref<3x8x512xf32, #tpu.memory_space<vmem>>, %arg9: memref<3x8x25xf32, #tpu.memory_space<vmem>>) attributes {dimension_semantics = [#tpu.dimension_semantics<parallel>], iteration_bounds = array<i64: 1>, scalar_prefetch = 0 : i64, scratch_operands = 0 : i64, tpu.core_type = #tpu.core_type<tc>, window_params = [{pipeline_mode = #tpu.pipeline_mode<synchronous>, transform_indices = @transform_0, window_bounds = array<i64: 1, 1536>}, {pipeline_mode = #tpu.pipeline_mode<synchronous>, transform_indices = @transform_1, window_bounds = array<i64: 256, 1536>}, {pipeline_mode = #tpu.pipeline_mode<synchronous>, transform_indices = @transform_2, window_bounds = array<i64: 24, 512>}, {pipeline_mode = #tpu.pipeline_mode<synchronous>, transform_indices = @transform_3, window_bounds = array<i64: 25, 512>}, {transform_indices = @transform_4, window_bounds = array<i64: 8, 256>}, {transform_indices = @transform_5, window_bounds = array<i64: 16, 8, 24>}, {transform_indices = @transform_6, window_bounds = array<i64: 8, 4>}, {transform_indices = @transform_7, window_bounds = array<i64: 3, 8, 512>}, {transform_indices = @transform_8, window_bounds = array<i64: 3, 8, 25>}]} {
    %c0 = arith.constant 0 : index
    %c0_0 = arith.constant 0 : index
    %0 = vector.load %arg5[%c0, %c0_0] : memref<8x256xbf16, #tpu.memory_space<vmem>>, vector<8x256xbf16>
    %c0_1 = arith.constant 0 : index
    %c0_2 = arith.constant 0 : index
    %1 = vector.load %arg2[%c0_1, %c0_2] : memref<256x1536xbf16, #tpu.memory_space<vmem>>, vector<256x1536xbf16>
    %cst = arith.constant dense<0.000000e+00> : vector<8x1536xf32>
    %2 = tpu.matmul %0, %1, %cst {dimension_numbers = #tpu.dot_dimension_numbers<[1], [0], [0], [1], [0, 0, 1, 1], [], []>} : vector<8x256xbf16>, vector<256x1536xbf16>, vector<8x1536xf32> -> vector<8x1536xf32>
    %c0_3 = arith.constant 0 : index
    %c0_4 = arith.constant 0 : index
    %3 = vector.load %arg1[%c0_3, %c0_4] : memref<1x1536xf32, #tpu.memory_space<vmem>>, vector<1x1536xf32>
    %4 = vector.broadcast %3 : vector<1x1536xf32> to vector<8x1536xf32>
    %5 = arith.addf %4, %2 : vector<8x1536xf32>
    %6 = vector.extract_strided_slice %5 {offsets = [0, 0], sizes = [8, 512], strides = [1, 1]} : vector<8x1536xf32> to vector<8x512xf32>
    %7 = vector.extract_strided_slice %5 {offsets = [0, 512], sizes = [8, 512], strides = [1, 1]} : vector<8x1536xf32> to vector<8x512xf32>
    %8 = vector.extract_strided_slice %5 {offsets = [0, 1024], sizes = [8, 512], strides = [1, 1]} : vector<8x1536xf32> to vector<8x512xf32>
    %c0_5 = arith.constant 0 : index
    %c0_6 = arith.constant 0 : index
    %c0_7 = arith.constant 0 : index
    %9 = vector.load %arg6[%c0_5, %c0_6, %c0_7] : memref<16x8x24xbf16, #tpu.memory_space<vmem>>, vector<16x8x24xbf16>
    %10 = vector.shape_cast %9 : vector<16x8x24xbf16> to vector<128x24xbf16>
    %c0_8 = arith.constant 0 : index
    %c0_9 = arith.constant 0 : index
    %11 = vector.load %arg3[%c0_8, %c0_9] : memref<24x512xbf16, #tpu.memory_space<vmem>>, vector<24x512xbf16>
    %cst_10 = arith.constant dense<0.000000e+00> : vector<128x512xf32>
    %12 = tpu.matmul %10, %11, %cst_10 {dimension_numbers = #tpu.dot_dimension_numbers<[1], [0], [0], [1], [0, 0, 1, 1], [], []>} : vector<128x24xbf16>, vector<24x512xbf16>, vector<128x512xf32> -> vector<128x512xf32>
    %13 = vector.extract_strided_slice %12 {offsets = [0, 0], sizes = [8, 512], strides = [1, 1]} : vector<128x512xf32> to vector<8x512xf32>
    %14 = arith.mulf %13, %6 : vector<8x512xf32>
    %15 = vector.extract_strided_slice %12 {offsets = [8, 0], sizes = [8, 512], strides = [1, 1]} : vector<128x512xf32> to vector<8x512xf32>
    %16 = arith.mulf %15, %7 : vector<8x512xf32>
    %17 = arith.addf %14, %16 : vector<8x512xf32>
    %18 = vector.extract_strided_slice %12 {offsets = [16, 0], sizes = [8, 512], strides = [1, 1]} : vector<128x512xf32> to vector<8x512xf32>
    %19 = arith.mulf %18, %8 : vector<8x512xf32>
    %20 = arith.addf %17, %19 : vector<8x512xf32>
    %21 = vector.extract_strided_slice %12 {offsets = [24, 0], sizes = [8, 512], strides = [1, 1]} : vector<128x512xf32> to vector<8x512xf32>
    %22 = arith.addf %20, %21 : vector<8x512xf32>
    %23 = vector.extract_strided_slice %12 {offsets = [32, 0], sizes = [8, 512], strides = [1, 1]} : vector<128x512xf32> to vector<8x512xf32>
    %24 = arith.mulf %23, %6 : vector<8x512xf32>
    %25 = vector.extract_strided_slice %12 {offsets = [40, 0], sizes = [8, 512], strides = [1, 1]} : vector<128x512xf32> to vector<8x512xf32>
    %26 = arith.mulf %25, %7 : vector<8x512xf32>
    %27 = arith.addf %24, %26 : vector<8x512xf32>
    %28 = vector.extract_strided_slice %12 {offsets = [48, 0], sizes = [8, 512], strides = [1, 1]} : vector<128x512xf32> to vector<8x512xf32>
    %29 = arith.mulf %28, %8 : vector<8x512xf32>
    %30 = arith.addf %27, %29 : vector<8x512xf32>
    %31 = vector.extract_strided_slice %12 {offsets = [56, 0], sizes = [8, 512], strides = [1, 1]} : vector<128x512xf32> to vector<8x512xf32>
    %32 = arith.addf %30, %31 : vector<8x512xf32>
    %33 = vector.extract_strided_slice %12 {offsets = [64, 0], sizes = [8, 512], strides = [1, 1]} : vector<128x512xf32> to vector<8x512xf32>
    %34 = arith.mulf %33, %6 : vector<8x512xf32>
    %35 = vector.extract_strided_slice %12 {offsets = [72, 0], sizes = [8, 512], strides = [1, 1]} : vector<128x512xf32> to vector<8x512xf32>
    %36 = arith.mulf %35, %7 : vector<8x512xf32>
    %37 = arith.addf %34, %36 : vector<8x512xf32>
    %38 = vector.extract_strided_slice %12 {offsets = [80, 0], sizes = [8, 512], strides = [1, 1]} : vector<128x512xf32> to vector<8x512xf32>
    %39 = arith.mulf %38, %8 : vector<8x512xf32>
    %40 = arith.addf %37, %39 : vector<8x512xf32>
    %41 = vector.extract_strided_slice %12 {offsets = [88, 0], sizes = [8, 512], strides = [1, 1]} : vector<128x512xf32> to vector<8x512xf32>
    %42 = arith.addf %40, %41 : vector<8x512xf32>
    %c0_11 = arith.constant 0 : index
    %c0_12 = arith.constant 0 : index
    %43 = vector.load %arg7[%c0_11, %c0_12] : memref<8x4xf32, #tpu.memory_space<vmem>>, vector<8x1xf32>
    %c0_13 = arith.constant 0 : index
    %c1 = arith.constant 1 : index
    %44 = vector.load %arg7[%c0_13, %c1] : memref<8x4xf32, #tpu.memory_space<vmem>>, vector<8x1xf32>
    %c0_14 = arith.constant 0 : index
    %c2 = arith.constant 2 : index
    %45 = vector.load %arg7[%c0_14, %c2] : memref<8x4xf32, #tpu.memory_space<vmem>>, vector<8x1xf32>
    %c0_15 = arith.constant 0 : index
    %c3 = arith.constant 3 : index
    %46 = vector.load %arg7[%c0_15, %c3] : memref<8x4xf32, #tpu.memory_space<vmem>>, vector<8x1xf32>
    %47 = vector.broadcast %43 : vector<8x1xf32> to vector<8x512xf32>
    %48 = arith.mulf %22, %47 : vector<8x512xf32>
    %49 = vector.broadcast %44 : vector<8x1xf32> to vector<8x512xf32>
    %50 = arith.addf %48, %49 : vector<8x512xf32>
    %c0_16 = arith.constant 0 : index
    %c0_17 = arith.constant 0 : index
    %c0_18 = arith.constant 0 : index
    %51 = vector.load %arg8[%c0_16, %c0_17, %c0_18] : memref<3x8x512xf32, #tpu.memory_space<vmem>>, vector<1x8x512xf32>
    %52 = vector.shape_cast %51 : vector<1x8x512xf32> to vector<8x512xf32>
    %53 = vector.shape_cast %50 : vector<8x512xf32> to vector<1x8x512xf32>
    tpu.vector_store %arg8[%c0_16, %c0_17, %c0_18], %53 {strides = array<i32>} : memref<3x8x512xf32, #tpu.memory_space<vmem>>, vector<1x8x512xf32>,
    %54 = vector.broadcast %43 : vector<8x1xf32> to vector<8x512xf32>
    %55 = arith.mulf %32, %54 : vector<8x512xf32>
    %56 = vector.broadcast %45 : vector<8x1xf32> to vector<8x512xf32>
    %57 = arith.addf %55, %56 : vector<8x512xf32>
    %c1_19 = arith.constant 1 : index
    %c0_20 = arith.constant 0 : index
    %c0_21 = arith.constant 0 : index
    %58 = vector.load %arg8[%c1_19, %c0_20, %c0_21] : memref<3x8x512xf32, #tpu.memory_space<vmem>>, vector<1x8x512xf32>
    %59 = vector.shape_cast %58 : vector<1x8x512xf32> to vector<8x512xf32>
    %60 = vector.shape_cast %57 : vector<8x512xf32> to vector<1x8x512xf32>
    tpu.vector_store %arg8[%c1_19, %c0_20, %c0_21], %60 {strides = array<i32>} : memref<3x8x512xf32, #tpu.memory_space<vmem>>, vector<1x8x512xf32>,
    %61 = vector.broadcast %43 : vector<8x1xf32> to vector<8x512xf32>
    %62 = arith.mulf %42, %61 : vector<8x512xf32>
    %63 = vector.broadcast %46 : vector<8x1xf32> to vector<8x512xf32>
    %64 = arith.addf %62, %63 : vector<8x512xf32>
    %c2_22 = arith.constant 2 : index
    %c0_23 = arith.constant 0 : index
    %c0_24 = arith.constant 0 : index
    %65 = vector.load %arg8[%c2_22, %c0_23, %c0_24] : memref<3x8x512xf32, #tpu.memory_space<vmem>>, vector<1x8x512xf32>
    %66 = vector.shape_cast %65 : vector<1x8x512xf32> to vector<8x512xf32>
    %67 = vector.shape_cast %64 : vector<8x512xf32> to vector<1x8x512xf32>
    tpu.vector_store %arg8[%c2_22, %c0_23, %c0_24], %67 {strides = array<i32>} : memref<3x8x512xf32, #tpu.memory_space<vmem>>, vector<1x8x512xf32>,
    %68 = tpu.concatenate %22, %32, %42 in 0 : vector<8x512xf32>, vector<8x512xf32>, vector<8x512xf32> -> vector<24x512xf32>
    %69 = arith.truncf %68 : vector<24x512xf32> to vector<24x512xbf16>
    %c0_25 = arith.constant 0 : index
    %c0_26 = arith.constant 0 : index
    %70 = vector.load %arg4[%c0_25, %c0_26] : memref<25x512xbf16, #tpu.memory_space<vmem>>, vector<25x512xbf16>
    %cst_27 = arith.constant dense<0.000000e+00> : vector<24x25xf32>
    %71 = tpu.matmul %69, %70, %cst_27 {dimension_numbers = #tpu.dot_dimension_numbers<[1], [1], [0], [0], [0, 0, 1, 0], [], []>} : vector<24x512xbf16>, vector<25x512xbf16>, vector<24x25xf32> -> vector<24x25xf32>
    %72 = vector.extract_strided_slice %71 {offsets = [0, 0], sizes = [8, 25], strides = [1, 1]} : vector<24x25xf32> to vector<8x25xf32>
    %73 = vector.broadcast %43 : vector<8x1xf32> to vector<8x25xf32>
    %74 = arith.mulf %72, %73 : vector<8x25xf32>
    %75 = vector.broadcast %44 : vector<8x1xf32> to vector<8x25xf32>
    %76 = arith.addf %74, %75 : vector<8x25xf32>
    %c0_28 = arith.constant 0 : index
    %c0_29 = arith.constant 0 : index
    %c0_30 = arith.constant 0 : index
    %77 = vector.load %arg9[%c0_28, %c0_29, %c0_30] : memref<3x8x25xf32, #tpu.memory_space<vmem>>, vector<1x8x25xf32>
    %78 = vector.shape_cast %77 : vector<1x8x25xf32> to vector<8x25xf32>
    %79 = vector.shape_cast %76 : vector<8x25xf32> to vector<1x8x25xf32>
    tpu.vector_store %arg9[%c0_28, %c0_29, %c0_30], %79 {strides = array<i32>} : memref<3x8x25xf32, #tpu.memory_space<vmem>>, vector<1x8x25xf32>,
    %80 = vector.extract_strided_slice %71 {offsets = [8, 0], sizes = [8, 25], strides = [1, 1]} : vector<24x25xf32> to vector<8x25xf32>
    %81 = vector.broadcast %43 : vector<8x1xf32> to vector<8x25xf32>
    %82 = arith.mulf %80, %81 : vector<8x25xf32>
    %83 = vector.broadcast %45 : vector<8x1xf32> to vector<8x25xf32>
    %84 = arith.addf %82, %83 : vector<8x25xf32>
    %c1_31 = arith.constant 1 : index
    %c0_32 = arith.constant 0 : index
    %c0_33 = arith.constant 0 : index
    %85 = vector.load %arg9[%c1_31, %c0_32, %c0_33] : memref<3x8x25xf32, #tpu.memory_space<vmem>>, vector<1x8x25xf32>
    %86 = vector.shape_cast %85 : vector<1x8x25xf32> to vector<8x25xf32>
    %87 = vector.shape_cast %84 : vector<8x25xf32> to vector<1x8x25xf32>
    tpu.vector_store %arg9[%c1_31, %c0_32, %c0_33], %87 {strides = array<i32>} : memref<3x8x25xf32, #tpu.memory_space<vmem>>, vector<1x8x25xf32>,
    %88 = vector.extract_strided_slice %71 {offsets = [16, 0], sizes = [8, 25], strides = [1, 1]} : vector<24x25xf32> to vector<8x25xf32>
    %89 = vector.broadcast %43 : vector<8x1xf32> to vector<8x25xf32>
    %90 = arith.mulf %88, %89 : vector<8x25xf32>
    %91 = vector.broadcast %46 : vector<8x1xf32> to vector<8x25xf32>
    %92 = arith.addf %90, %91 : vector<8x25xf32>
    %c2_34 = arith.constant 2 : index
    %c0_35 = arith.constant 0 : index
    %c0_36 = arith.constant 0 : index
    %93 = vector.load %arg9[%c2_34, %c0_35, %c0_36] : memref<3x8x25xf32, #tpu.memory_space<vmem>>, vector<1x8x25xf32>
    %94 = vector.shape_cast %93 : vector<1x8x25xf32> to vector<8x25xf32>
    %95 = vector.shape_cast %92 : vector<8x25xf32> to vector<1x8x25xf32>
    tpu.vector_store %arg9[%c2_34, %c0_35, %c0_36], %95 {strides = array<i32>} : memref<3x8x25xf32, #tpu.memory_space<vmem>>, vector<1x8x25xf32>,
    return
  }
  func.func @transform_0(%arg0: i32) -> (i32, i32) {
    %c0_i32 = arith.constant 0 : i32
    %c0_i32_0 = arith.constant 0 : i32
    %c0_i32_1 = arith.constant 0 : i32
    return %c0_i32, %c0_i32_0 : i32, i32
  }
  func.func @transform_1(%arg0: i32) -> (i32, i32) {
    %c0_i32 = arith.constant 0 : i32
    %c0_i32_0 = arith.constant 0 : i32
    %c0_i32_1 = arith.constant 0 : i32
    return %c0_i32, %c0_i32_0 : i32, i32
  }
  func.func @transform_2(%arg0: i32) -> (i32, i32) {
    %c0_i32 = arith.constant 0 : i32
    %c0_i32_0 = arith.constant 0 : i32
    %c0_i32_1 = arith.constant 0 : i32
    return %c0_i32, %c0_i32_0 : i32, i32
  }
  func.func @transform_3(%arg0: i32) -> (i32, i32) {
    %c0_i32 = arith.constant 0 : i32
    %c0_i32_0 = arith.constant 0 : i32
    %c0_i32_1 = arith.constant 0 : i32
    return %c0_i32, %c0_i32_0 : i32, i32
  }
  func.func @transform_4(%arg0: i32) -> (i32, i32) {
    %c0_i32 = arith.constant 0 : i32
    %c0_i32_0 = arith.constant 0 : i32
    return %arg0, %c0_i32 : i32, i32
  }
  func.func @transform_5(%arg0: i32) -> (i32, i32, i32) {
    %c0_i32 = arith.constant 0 : i32
    %c0_i32_0 = arith.constant 0 : i32
    %c0_i32_1 = arith.constant 0 : i32
    return %c0_i32, %arg0, %c0_i32_0 : i32, i32, i32
  }
  func.func @transform_6(%arg0: i32) -> (i32, i32) {
    %c0_i32 = arith.constant 0 : i32
    %c0_i32_0 = arith.constant 0 : i32
    return %arg0, %c0_i32 : i32, i32
  }
  func.func @transform_7(%arg0: i32) -> (i32, i32, i32) {
    %c0_i32 = arith.constant 0 : i32
    %c0_i32_0 = arith.constant 0 : i32
    %c0_i32_1 = arith.constant 0 : i32
    return %c0_i32, %arg0, %c0_i32_0 : i32, i32, i32
  }
  func.func @transform_8(%arg0: i32) -> (i32, i32, i32) {
    %c0_i32 = arith.constant 0 : i32
    %c0_i32_0 = arith.constant 0 : i32
    %c0_i32_1 = arith.constant 0 : i32
    return %c0_i32, %arg0, %c0_i32_0 : i32, i32, i32
  }
}

</mosaic_0001>

<llo_original>
// kernel: tpu_custom_call.1
$region0: #{tpu_custom_call.1}
  #allocation0 [shape = 'u32[]', space=smem, size = 0x4, offset = 0x4, fixed_abs, tag = 'smem constant byte address 0x4 - core index']
  #allocation1 [shape = 'u32[144,128]{1,0:T(1,128)}', space=vmem, size = 0x12000, scoped, tag = 'internal scratch']
  %s0 = inlined_call_operand.vmem [shape: f32[1,1536], index: 0, kind: input, shape index: {}]
  %s1 = inlined_call_operand.hbm [shape: bf16[256,1536], index: 1, kind: input, shape index: {}]
  %s2 = inlined_call_operand.hbm [shape: bf16[24,512], index: 2, kind: input, shape index: {}]
  %s3 = inlined_call_operand.hbm [shape: bf16[25,512], index: 3, kind: input, shape index: {}]
  %s4 = inlined_call_operand.hbm [shape: bf16[8,256], index: 4, kind: input, shape index: {}]
  %s5 = inlined_call_operand.hbm [shape: bf16[16,8,24], index: 5, kind: input, shape index: {}]
  %s6 = inlined_call_operand.vmem [shape: f32[8,4], index: 6, kind: input, shape index: {}]
  %s7 = inlined_call_operand.hbm [shape: f32[3,8,512], index: 7, kind: output, shape index: {0}]
  %s8 = inlined_call_operand.hbm [shape: f32[3,8,25], index: 8, kind: output, shape index: {1}]
  %9 = xla_tuple %s7, %s8
  %s10 = sld [smem:[#allocation0]]
  $region66: #{tpu_custom_call.1} parent=0
    _
  %s12 = ssub.s32 1, %s10
  %s13 = scalar_select 0, %s12, %s10
  $region1: #{tpu_custom_call.1} parent=0
    #allocation2 [shape = 'u8[786432]{0}', space=vmem, size = 0xc0000, scoped, tag = 'input window, operand 1, single buffered']
    #allocation3 [shape = 's32[1]{0}', space=sflag, size = 0x4, scoped, tag = 'scoped memory for tpu_custom_call.1']
    #allocation4 [shape = 's32[1]{0}', space=sflag, size = 0x4, scoped, tag = 'scoped memory for tpu_custom_call.1']
    #allocation5 [shape = 'u8[24576]{0}', space=vmem, size = 0x6000, scoped, tag = 'input window, operand 2, single buffered']
    #allocation6 [shape = 's32[1]{0}', space=sflag, size = 0x4, scoped, tag = 'scoped memory for tpu_custom_call.1']
    #allocation7 [shape = 'u8[32768]{0}', space=vmem, size = 0x8000, scoped, tag = 'input window, operand 3, single buffered']
    #allocation8 [shape = 'u8[4096]{0}', space=vmem, size = 0x1000, scoped, tag = 'input window, operand 4, single buffered']
    #allocation9 [shape = 's32[1]{0}', space=sflag, size = 0x4, scoped, tag = 'scoped memory for tpu_custom_call.1']
    #allocation10 [shape = 'u8[32768]{0}', space=vmem, size = 0x8000, scoped, tag = 'input window, operand 5, single buffered']
    #allocation11 [shape = 'u8[49152]{0}', space=vmem, size = 0xc000, scoped, tag = 'output window, operand 0, single buffered']
    #allocation12 [shape = 'u8[12288]{0}', space=vmem, size = 0x3000, scoped, tag = 'output window, operand 1, single buffered']
    #allocation13 [shape = 's32[1]{0}', space=sflag, size = 0x4, scoped, tag = 'scoped memory for tpu_custom_call.1']
    %14 = vsyncpa [#allocation3], 0
    %15 = vsyncpa [#allocation6], 0
    %16 = vsyncpa [#allocation9], 0
    %17 = vsyncpa [#allocation4], 0
    %18 = vsyncpa [#allocation13], 0
    // Predicated region
    $region2: #{tpu_custom_call.1} parent=1 // pred_check
      _
    $region3: #{tpu_custom_call.1} parent=1 // pred_check_branch
      %20 = sbr.rel (0) target = $region5
    $region4: #{tpu_custom_call.1} parent=1 // pred_region
      _
    $region5: #{tpu_custom_call.1} parent=1 // pred_fallthru
      _
    // Predicated region
    $region6: #{tpu_custom_call.1} parent=1 // pred_check
      _
    $region7: #{tpu_custom_call.1} parent=1 // pred_check_branch
      %22 = sbr.rel (0) target = $region9
    $region8: #{tpu_custom_call.1} parent=1 // pred_region
      %s24 = ssub.s32 24576, 24576
      %25 = vsyncadd [#allocation3], %s24
      %s26 = sshll.u32 [#allocation2], 4
      %s27 = int_to_ptr.vmem [resolvable:$true] %s26
      %32 = dma.hbm_to_vmem [thread:$0]  %s1, 24576, %s27, [#allocation3], 768, 768, 48
    $region9: #{tpu_custom_call.1} parent=1 // pred_fallthru
      _
    // Predicated region
    $region10: #{tpu_custom_call.1} parent=1 // pred_check
      _
    $region11: #{tpu_custom_call.1} parent=1 // pred_check_branch
      %34 = sbr.rel (0) target = $region13
    $region12: #{tpu_custom_call.1} parent=1 // pred_region
      %s36 = ssub.s32 768, 768
      %37 = vsyncadd [#allocation6], %s36
      %s38 = sshll.u32 [#allocation5], 4
      %s39 = int_to_ptr.vmem [resolvable:$true] %s38
      %44 = dma.hbm_to_vmem [thread:$0]  %s2, 768, %s39, [#allocation6], 256, 256, 16
    $region13: #{tpu_custom_call.1} parent=1 // pred_fallthru
      _
    // Predicated region
    $region14: #{tpu_custom_call.1} parent=1 // pred_check
      _
    $region15: #{tpu_custom_call.1} parent=1 // pred_check_branch
      %46 = sbr.rel (0) target = $region17
    $region16: #{tpu_custom_call.1} parent=1 // pred_region
      %s48 = ssub.s32 1024, 1024
      %49 = vsyncadd [#allocation6], %s48
      %s50 = sshll.u32 [#allocation7], 4
      %s51 = int_to_ptr.vmem [resolvable:$true] %s50
      %56 = dma.hbm_to_vmem [thread:$0]  %s3, 1024, %s51, [#allocation6], 256, 256, 16
    $region17: #{tpu_custom_call.1} parent=1 // pred_fallthru
      _
    // Predicated region
    $region18: #{tpu_custom_call.1} parent=1 // pred_check
      _
    $region19: #{tpu_custom_call.1} parent=1 // pred_check_branch
      %58 = sbr.rel (0) target = $region21
    $region20: #{tpu_custom_call.1} parent=1 // pred_region
      %s60 = ssub.s32 128, 128
      %61 = vsyncadd [#allocation9], %s60
      %s63 = sshll.u32 [#allocation8], 4
      %s64 = int_to_ptr.vmem [resolvable:$true] %s63
      %66 = dma.hbm_to_vmem [thread:$0]  %s4, 128, %s64, [#allocation9]
    $region21: #{tpu_custom_call.1} parent=1 // pred_fallthru
      _
    // Predicated region
    $region22: #{tpu_custom_call.1} parent=1 // pred_check
      _
    $region23: #{tpu_custom_call.1} parent=1 // pred_check_branch
      %68 = sbr.rel (0) target = $region25
    $region24: #{tpu_custom_call.1} parent=1 // pred_region
      %s70 = ssub.s32 1024, 1024
      %71 = vsyncadd [#allocation9], %s70
      %s72 = sshll.u32 [#allocation10], 4
      %s73 = int_to_ptr.vmem [resolvable:$true] %s72
      %78 = dma.hbm_to_vmem [thread:$0]  %s5, 1024, %s73, [#allocation9], 64, 64, 4
    $region25: #{tpu_custom_call.1} parent=1 // pred_fallthru
      _
    // Predicated region
    $region26: #{tpu_custom_call.1} parent=1 // pred_check
      _
    $region27: #{tpu_custom_call.1} parent=1 // pred_check_branch
      %80 = sbr.rel (0) target = $region29
    $region28: #{tpu_custom_call.1} parent=1 // pred_region
      _
    $region29: #{tpu_custom_call.1} parent=1 // pred_fallthru
      _
    // Predicated region
    $region30: #{tpu_custom_call.1} parent=1 // pred_check
      _
    $region31: #{tpu_custom_call.1} parent=1 // pred_check_branch
      %82 = sbr.rel (0) target = $region33
    $region32: #{tpu_custom_call.1} parent=1 // pred_region
      %83 = dma.done [#allocation3], 24576
    $region33: #{tpu_custom_call.1} parent=1 // pred_fallthru
      _
    // Predicated region
    $region34: #{tpu_custom_call.1} parent=1 // pred_check
      _
    $region35: #{tpu_custom_call.1} parent=1 // pred_check_branch
      %85 = sbr.rel (0) target = $region37
    $region36: #{tpu_custom_call.1} parent=1 // pred_region
      %86 = dma.done [#allocation6], 768
    $region37: #{tpu_custom_call.1} parent=1 // pred_fallthru
      _
    // Predicated region
    $region38: #{tpu_custom_call.1} parent=1 // pred_check
      _
    $region39: #{tpu_custom_call.1} parent=1 // pred_check_branch
      %88 = sbr.rel (0) target = $region41
    $region40: #{tpu_custom_call.1} parent=1 // pred_region
      %89 = dma.done [#allocation6], 1024
    $region41: #{tpu_custom_call.1} parent=1 // pred_fallthru
      _
    // Predicated region
    $region42: #{tpu_custom_call.1} parent=1 // pred_check
      _
    $region43: #{tpu_custom_call.1} parent=1 // pred_check_branch
      %91 = sbr.rel (0) target = $region45
    $region44: #{tpu_custom_call.1} parent=1 // pred_region
      %92 = dma.done [#allocation9], 128
    $region45: #{tpu_custom_call.1} parent=1 // pred_fallthru
      _
    // Predicated region
    $region46: #{tpu_custom_call.1} parent=1 // pred_check
      _
    $region47: #{tpu_custom_call.1} parent=1 // pred_check_branch
      %94 = sbr.rel (0) target = $region49
    $region48: #{tpu_custom_call.1} parent=1 // pred_region
      %95 = dma.done [#allocation9], 1024
    $region49: #{tpu_custom_call.1} parent=1 // pred_fallthru
      _
    %v97 = vld [vmem:[#allocation8] sm:$0xff]
    %v98 = vld [vmem:[#allocation2] sm:$0xff]
    %v99 = vld [vmem:[#allocation2 + $0x8] sm:$0xff]
    %v100 = vld [vmem:[#allocation2 + $0x10] sm:$0xff]
    %v101 = vld [vmem:[#allocation2 + $0x18] sm:$0xff]
    %v102 = vld [vmem:[#allocation2 + $0x20] sm:$0xff]
    %v103 = vld [vmem:[#allocation2 + $0x28] sm:$0xff]
    %v104 = vld [vmem:[#allocation2 + $0x30] sm:$0xff]
    %v105 = vld [vmem:[#allocation2 + $0x38] sm:$0xff]
    %v106 = vld [vmem:[#allocation2 + $0x40] sm:$0xff]
    %v107 = vld [vmem:[#allocation2 + $0x48] sm:$0xff]
    %v108 = vld [vmem:[#allocation2 + $0x50] sm:$0xff]
    %v109 = vld [vmem:[#allocation2 + $0x58] sm:$0xff]
    %v110 = vld [vmem:[#allocation2 + $0x60] sm:$0xff]
    %v111 = vld [vmem:[#allocation2 + $0x68] sm:$0xff]
    %v112 = vld [vmem:[#allocation2 + $0x70] sm:$0xff]
    %v113 = vld [vmem:[#allocation2 + $0x78] sm:$0xff]
    %v114 = vld [vmem:[#allocation2 + $0x80] sm:$0xff]
    %v115 = vld [vmem:[#allocation2 + $0x88] sm:$0xff]
    %v116 = vld [vmem:[#allocation2 + $0x90] sm:$0xff]
    %v117 = vld [vmem:[#allocation2 + $0x98] sm:$0xff]
    %v118 = vld [vmem:[#allocation2 + $0xa0] sm:$0xff]
    %v119 = vld [vmem:[#allocation2 + $0xa8] sm:$0xff]
    %v120 = vld [vmem:[#allocation2 + $0xb0] sm:$0xff]
    %v121 = vld [vmem:[#allocation2 + $0xb8] sm:$0xff]
    %v122 = vld [vmem:[#allocation2 + $0xc0] sm:$0xff]
    %v123 = vld [vmem:[#allocation2 + $0xc8] sm:$0xff]
    %v124 = vld [vmem:[#allocation2 + $0xd0] sm:$0xff]
    %v125 = vld [vmem:[#allocation2 + $0xd8] sm:$0xff]
    %v126 = vld [vmem:[#allocation2 + $0xe0] sm:$0xff]
    %v127 = vld [vmem:[#allocation2 + $0xe8] sm:$0xff]
    %v128 = vld [vmem:[#allocation2 + $0xf0] sm:$0xff]
    %v129 = vld [vmem:[#allocation2 + $0xf8] sm:$0xff]
    %v130 = vld [vmem:[#allocation2 + $0x100] sm:$0xff]
    %v131 = vld [vmem:[#allocation2 + $0x108] sm:$0xff]
    %v132 = vld [vmem:[#allocation2 + $0x110] sm:$0xff]
    %v133 = vld [vmem:[#allocation2 + $0x118] sm:$0xff]
    %v134 = vld [vmem:[#allocation2 + $0x120] sm:$0xff]
    %v135 = vld [vmem:[#allocation2 + $0x128] sm:$0xff]
    %v136 = vld [vmem:[#allocation2 + $0x130] sm:$0xff]
    %v137 = vld [vmem:[#allocation2 + $0x138] sm:$0xff]
    %v138 = vld [vmem:[#allocation2 + $0x140] sm:$0xff]
    %v139 = vld [vmem:[#allocation2 + $0x148] sm:$0xff]
    %v140 = vld [vmem:[#allocation2 + $0x150] sm:$0xff]
    %v141 = vld [vmem:[#allocation2 + $0x158] sm:$0xff]
    %v142 = vld [vmem:[#allocation2 + $0x160] sm:$0xff]
    %v143 = vld [vmem:[#allocation2 + $0x168] sm:$0xff]
    %v144 = vld [vmem:[#allocation2 + $0x170] sm:$0xff]
    %v145 = vld [vmem:[#allocation2 + $0x178] sm:$0xff]
    %v146 = vld [vmem:[#allocation2 + $0x180] sm:$0xff]
    %v147 = vld [vmem:[#allocation2 + $0x188] sm:$0xff]
    %v148 = vld [vmem:[#allocation2 + $0x190] sm:$0xff]
    %v149 = vld [vmem:[#allocation2 + $0x198] sm:$0xff]
    %v150 = vld [vmem:[#allocation2 + $0x1a0] sm:$0xff]
    %v151 = vld [vmem:[#allocation2 + $0x1a8] sm:$0xff]
    %v152 = vld [vmem:[#allocation2 + $0x1b0] sm:$0xff]
    %v153 = vld [vmem:[#allocation2 + $0x1b8] sm:$0xff]
    %v154 = vld [vmem:[#allocation2 + $0x1c0] sm:$0xff]
    %v155 = vld [vmem:[#allocation2 + $0x1c8] sm:$0xff]
    %v156 = vld [vmem:[#allocation2 + $0x1d0] sm:$0xff]
    %v157 = vld [vmem:[#allocation2 + $0x1d8] sm:$0xff]
    %v158 = vld [vmem:[#allocation2 + $0x1e0] sm:$0xff]
    %v159 = vld [vmem:[#allocation2 + $0x1e8] sm:$0xff]
    %v160 = vld [vmem:[#allocation2 + $0x1f0] sm:$0xff]
    %v161 = vld [vmem:[#allocation2 + $0x1f8] sm:$0xff]
    %v162 = vld [vmem:[#allocation2 + $0x200] sm:$0xff]
    %v163 = vld [vmem:[#allocation2 + $0x208] sm:$0xff]
    %v164 = vld [vmem:[#allocation2 + $0x210] sm:$0xff]
    %v165 = vld [vmem:[#allocation2 + $0x218] sm:$0xff]
    %v166 = vld [vmem:[#allocation2 + $0x220] sm:$0xff]
    %v167 = vld [vmem:[#allocation2 + $0x228] sm:$0xff]
    %v168 = vld [vmem:[#allocation2 + $0x230] sm:$0xff]
    %v169 = vld [vmem:[#allocation2 + $0x238] sm:$0xff]
    %v170 = vld [vmem:[#allocation2 + $0x240] sm:$0xff]
    %v171 = vld [vmem:[#allocation2 + $0x248] sm:$0xff]
    %v172 = vld [vmem:[#allocation2 + $0x250] sm:$0xff]
    %v173 = vld [vmem:[#allocation2 + $0x258] sm:$0xff]
    %v174 = vld [vmem:[#allocation2 + $0x260] sm:$0xff]
    %v175 = vld [vmem:[#allocation2 + $0x268] sm:$0xff]
    %v176 = vld [vmem:[#allocation2 + $0x270] sm:$0xff]
    %v177 = vld [vmem:[#allocation2 + $0x278] sm:$0xff]
    %v178 = vld [vmem:[#allocation2 + $0x280] sm:$0xff]
    %v179 = vld [vmem:[#allocation2 + $0x288] sm:$0xff]
    %v180 = vld [vmem:[#allocation2 + $0x290] sm:$0xff]
    %v181 = vld [vmem:[#allocation2 + $0x298] sm:$0xff]
    %v182 = vld [vmem:[#allocation2 + $0x2a0] sm:$0xff]
    %v183 = vld [vmem:[#allocation2 + $0x2a8] sm:$0xff]
    %v184 = vld [vmem:[#allocation2 + $0x2b0] sm:$0xff]
    %v185 = vld [vmem:[#allocation2 + $0x2b8] sm:$0xff]
    %v186 = vld [vmem:[#allocation2 + $0x2c0] sm:$0xff]
    %v187 = vld [vmem:[#allocation2 + $0x2c8] sm:$0xff]
    %v188 = vld [vmem:[#allocation2 + $0x2d0] sm:$0xff]
    %v189 = vld [vmem:[#allocation2 + $0x2d8] sm:$0xff]
    %v190 = vld [vmem:[#allocation2 + $0x2e0] sm:$0xff]
    %v191 = vld [vmem:[#allocation2 + $0x2e8] sm:$0xff]
    %v192 = vld [vmem:[#allocation2 + $0x2f0] sm:$0xff]
    %v193 = vld [vmem:[#allocation2 + $0x2f8] sm:$0xff]
    %v194 = vld [vmem:[#allocation2 + $0x300] sm:$0xff]
    %v195 = vld [vmem:[#allocation2 + $0x308] sm:$0xff]
    %v196 = vld [vmem:[#allocation2 + $0x310] sm:$0xff]
    %v197 = vld [vmem:[#allocation2 + $0x318] sm:$0xff]
    %v198 = vld [vmem:[#allocation2 + $0x320] sm:$0xff]
    %v199 = vld [vmem:[#allocation2 + $0x328] sm:$0xff]
    %v200 = vld [vmem:[#allocation2 + $0x330] sm:$0xff]
    %v201 = vld [vmem:[#allocation2 + $0x338] sm:$0xff]
    %v202 = vld [vmem:[#allocation2 + $0x340] sm:$0xff]
    %v203 = vld [vmem:[#allocation2 + $0x348] sm:$0xff]
    %v204 = vld [vmem:[#allocation2 + $0x350] sm:$0xff]
    %v205 = vld [vmem:[#allocation2 + $0x358] sm:$0xff]
    %v206 = vld [vmem:[#allocation2 + $0x360] sm:$0xff]
    %v207 = vld [vmem:[#allocation2 + $0x368] sm:$0xff]
    %v208 = vld [vmem:[#allocation2 + $0x370] sm:$0xff]
    %v209 = vld [vmem:[#allocation2 + $0x378] sm:$0xff]
    %v210 = vld [vmem:[#allocation2 + $0x380] sm:$0xff]
    %v211 = vld [vmem:[#allocation2 + $0x388] sm:$0xff]
    %v212 = vld [vmem:[#allocation2 + $0x390] sm:$0xff]
    %v213 = vld [vmem:[#allocation2 + $0x398] sm:$0xff]
    %v214 = vld [vmem:[#allocation2 + $0x3a0] sm:$0xff]
    %v215 = vld [vmem:[#allocation2 + $0x3a8] sm:$0xff]
    %v216 = vld [vmem:[#allocation2 + $0x3b0] sm:$0xff]
    %v217 = vld [vmem:[#allocation2 + $0x3b8] sm:$0xff]
    %v218 = vld [vmem:[#allocation2 + $0x3c0] sm:$0xff]
    %v219 = vld [vmem:[#allocation2 + $0x3c8] sm:$0xff]
    %v220 = vld [vmem:[#allocation2 + $0x3d0] sm:$0xff]
    %v221 = vld [vmem:[#allocation2 + $0x3d8] sm:$0xff]
    %v222 = vld [vmem:[#allocation2 + $0x3e0] sm:$0xff]
    %v223 = vld [vmem:[#allocation2 + $0x3e8] sm:$0xff]
    %v224 = vld [vmem:[#allocation2 + $0x3f0] sm:$0xff]
    %v225 = vld [vmem:[#allocation2 + $0x3f8] sm:$0xff]
    %v226 = vld [vmem:[#allocation2 + $0x400] sm:$0xff]
    %v227 = vld [vmem:[#allocation2 + $0x408] sm:$0xff]
    %v228 = vld [vmem:[#allocation2 + $0x410] sm:$0xff]
    %v229 = vld [vmem:[#allocation2 + $0x418] sm:$0xff]
    %v230 = vld [vmem:[#allocation2 + $0x420] sm:$0xff]
    %v231 = vld [vmem:[#allocation2 + $0x428] sm:$0xff]
    %v232 = vld [vmem:[#allocation2 + $0x430] sm:$0xff]
    %v233 = vld [vmem:[#allocation2 + $0x438] sm:$0xff]
    %v234 = vld [vmem:[#allocation2 + $0x440] sm:$0xff]
    %v235 = vld [vmem:[#allocation2 + $0x448] sm:$0xff]
    %v236 = vld [vmem:[#allocation2 + $0x450] sm:$0xff]
    %v237 = vld [vmem:[#allocation2 + $0x458] sm:$0xff]
    %v238 = vld [vmem:[#allocation2 + $0x460] sm:$0xff]
    %v239 = vld [vmem:[#allocation2 + $0x468] sm:$0xff]
    %v240 = vld [vmem:[#allocation2 + $0x470] sm:$0xff]
    %v241 = vld [vmem:[#allocation2 + $0x478] sm:$0xff]
    %v242 = vld [vmem:[#allocation2 + $0x480] sm:$0xff]
    %v243 = vld [vmem:[#allocation2 + $0x488] sm:$0xff]
    %v244 = vld [vmem:[#allocation2 + $0x490] sm:$0xff]
    %v245 = vld [vmem:[#allocation2 + $0x498] sm:$0xff]
    %v246 = vld [vmem:[#allocation2 + $0x4a0] sm:$0xff]
    %v247 = vld [vmem:[#allocation2 + $0x4a8] sm:$0xff]
    %v248 = vld [vmem:[#allocation2 + $0x4b0] sm:$0xff]
    %v249 = vld [vmem:[#allocation2 + $0x4b8] sm:$0xff]
    %v250 = vld [vmem:[#allocation2 + $0x4c0] sm:$0xff]
    %v251 = vld [vmem:[#allocation2 + $0x4c8] sm:$0xff]
    %v252 = vld [vmem:[#allocation2 + $0x4d0] sm:$0xff]
    %v253 = vld [vmem:[#allocation2 + $0x4d8] sm:$0xff]
    %v254 = vld [vmem:[#allocation2 + $0x4e0] sm:$0xff]
    %v255 = vld [vmem:[#allocation2 + $0x4e8] sm:$0xff]
    %v256 = vld [vmem:[#allocation2 + $0x4f0] sm:$0xff]
    %v257 = vld [vmem:[#allocation2 + $0x4f8] sm:$0xff]
    %v258 = vld [vmem:[#allocation2 + $0x500] sm:$0xff]
    %v259 = vld [vmem:[#allocation2 + $0x508] sm:$0xff]
    %v260 = vld [vmem:[#allocation2 + $0x510] sm:$0xff]
    %v261 = vld [vmem:[#allocation2 + $0x518] sm:$0xff]
    %v262 = vld [vmem:[#allocation2 + $0x520] sm:$0xff]
    %v263 = vld [vmem:[#allocation2 + $0x528] sm:$0xff]
    %v264 = vld [vmem:[#allocation2 + $0x530] sm:$0xff]
    %v265 = vld [vmem:[#allocation2 + $0x538] sm:$0xff]
    %v266 = vld [vmem:[#allocation2 + $0x540] sm:$0xff]
    %v267 = vld [vmem:[#allocation2 + $0x548] sm:$0xff]
    %v268 = vld [vmem:[#allocation2 + $0x550] sm:$0xff]
    %v269 = vld [vmem:[#allocation2 + $0x558] sm:$0xff]
    %v270 = vld [vmem:[#allocation2 + $0x560] sm:$0xff]
    %v271 = vld [vmem:[#allocation2 + $0x568] sm:$0xff]
    %v272 = vld [vmem:[#allocation2 + $0x570] sm:$0xff]
    %v273 = vld [vmem:[#allocation2 + $0x578] sm:$0xff]
    %v274 = vld [vmem:[#allocation2 + $0x580] sm:$0xff]
    %v275 = vld [vmem:[#allocation2 + $0x588] sm:$0xff]
    %v276 = vld [vmem:[#allocation2 + $0x590] sm:$0xff]
    %v277 = vld [vmem:[#allocation2 + $0x598] sm:$0xff]
    %v278 = vld [vmem:[#allocation2 + $0x5a0] sm:$0xff]
    %v279 = vld [vmem:[#allocation2 + $0x5a8] sm:$0xff]
    %v280 = vld [vmem:[#allocation2 + $0x5b0] sm:$0xff]
    %v281 = vld [vmem:[#allocation2 + $0x5b8] sm:$0xff]
    %v282 = vld [vmem:[#allocation2 + $0x5c0] sm:$0xff]
    %v283 = vld [vmem:[#allocation2 + $0x5c8] sm:$0xff]
    %v284 = vld [vmem:[#allocation2 + $0x5d0] sm:$0xff]
    %v285 = vld [vmem:[#allocation2 + $0x5d8] sm:$0xff]
    %v286 = vld [vmem:[#allocation2 + $0x5e0] sm:$0xff]
    %v287 = vld [vmem:[#allocation2 + $0x5e8] sm:$0xff]
    %v288 = vld [vmem:[#allocation2 + $0x5f0] sm:$0xff]
    %v289 = vld [vmem:[#allocation2 + $0x5f8] sm:$0xff]
    %v291 = vunpack.c.l.b16 %v97
    %v292 = vunpack.c.h.b16 %v97
    %v293 = vpack.c.b16 %v291, %v291
    %v294 = vpack.c.b16 %v292, %v292
    %v489 = vunpack.c.l.b16 %v98
    %v490 = vunpack.c.h.b16 %v98
    %v491 = vunpack.c.l.b16 %v99
    %v492 = vunpack.c.h.b16 %v99
    %v493 = vunpack.c.l.b16 %v100
    %v494 = vunpack.c.h.b16 %v100
    %v495 = vunpack.c.l.b16 %v101
    %v496 = vunpack.c.h.b16 %v101
    %v497 = vunpack.c.l.b16 %v102
    %v498 = vunpack.c.h.b16 %v102
    %v499 = vunpack.c.l.b16 %v103
    %v500 = vunpack.c.h.b16 %v103
    %v501 = vunpack.c.l.b16 %v104
    %v502 = vunpack.c.h.b16 %v104
    %v503 = vunpack.c.l.b16 %v105
    %v504 = vunpack.c.h.b16 %v105
    %v505 = vunpack.c.l.b16 %v106
    %v506 = vunpack.c.h.b16 %v106
    %v507 = vunpack.c.l.b16 %v107
    %v508 = vunpack.c.h.b16 %v107
    %v509 = vunpack.c.l.b16 %v108
    %v510 = vunpack.c.h.b16 %v108
    %v511 = vunpack.c.l.b16 %v109
    %v512 = vunpack.c.h.b16 %v109
    %v513 = vunpack.c.l.b16 %v110
    %v514 = vunpack.c.h.b16 %v110
    %v515 = vunpack.c.l.b16 %v111
    %v516 = vunpack.c.h.b16 %v111
    %v517 = vunpack.c.l.b16 %v112
    %v518 = vunpack.c.h.b16 %v112
    %v519 = vunpack.c.l.b16 %v113
    %v520 = vunpack.c.h.b16 %v113
    %v521 = vunpack.c.l.b16 %v114
    %v522 = vunpack.c.h.b16 %v114
    %v523 = vunpack.c.l.b16 %v115
    %v524 = vunpack.c.h.b16 %v115
    %v525 = vunpack.c.l.b16 %v116
    %v526 = vunpack.c.h.b16 %v116
    %v527 = vunpack.c.l.b16 %v117
    %v528 = vunpack.c.h.b16 %v117
    %v529 = vunpack.c.l.b16 %v118
    %v530 = vunpack.c.h.b16 %v118
    %v531 = vunpack.c.l.b16 %v119
    %v532 = vunpack.c.h.b16 %v119
    %v533 = vunpack.c.l.b16 %v120
    %v534 = vunpack.c.h.b16 %v120
    %v535 = vunpack.c.l.b16 %v121
    %v536 = vunpack.c.h.b16 %v121
    %v537 = vunpack.c.l.b16 %v122
    %v538 = vunpack.c.h.b16 %v122
    %v539 = vunpack.c.l.b16 %v123
    %v540 = vunpack.c.h.b16 %v123
    %v541 = vunpack.c.l.b16 %v124
    %v542 = vunpack.c.h.b16 %v124
    %v543 = vunpack.c.l.b16 %v125
    %v544 = vunpack.c.h.b16 %v125
    %v545 = vunpack.c.l.b16 %v126
    %v546 = vunpack.c.h.b16 %v126
    %v547 = vunpack.c.l.b16 %v127
    %v548 = vunpack.c.h.b16 %v127
    %v549 = vunpack.c.l.b16 %v128
    %v550 = vunpack.c.h.b16 %v128
    %v551 = vunpack.c.l.b16 %v129
    %v552 = vunpack.c.h.b16 %v129
    %v553 = vunpack.c.l.b16 %v130
    %v554 = vunpack.c.h.b16 %v130
    %v555 = vunpack.c.l.b16 %v131
    %v556 = vunpack.c.h.b16 %v131
    %v557 = vunpack.c.l.b16 %v132
    %v558 = vunpack.c.h.b16 %v132
    %v559 = vunpack.c.l.b16 %v133
    %v560 = vunpack.c.h.b16 %v133
    %v561 = vunpack.c.l.b16 %v134
    %v562 = vunpack.c.h.b16 %v134
    %v563 = vunpack.c.l.b16 %v135
    %v564 = vunpack.c.h.b16 %v135
    %v565 = vunpack.c.l.b16 %v136
    %v566 = vunpack.c.h.b16 %v136
    %v567 = vunpack.c.l.b16 %v137
    %v568 = vunpack.c.h.b16 %v137
    %v569 = vunpack.c.l.b16 %v138
    %v570 = vunpack.c.h.b16 %v138
    %v571 = vunpack.c.l.b16 %v139
    %v572 = vunpack.c.h.b16 %v139
    %v573 = vunpack.c.l.b16 %v140
    %v574 = vunpack.c.h.b16 %v140
    %v575 = vunpack.c.l.b16 %v141
    %v576 = vunpack.c.h.b16 %v141
    %v577 = vunpack.c.l.b16 %v142
    %v578 = vunpack.c.h.b16 %v142
    %v579 = vunpack.c.l.b16 %v143
    %v580 = vunpack.c.h.b16 %v143
    %v581 = vunpack.c.l.b16 %v144
    %v582 = vunpack.c.h.b16 %v144
    %v583 = vunpack.c.l.b16 %v145
    %v584 = vunpack.c.h.b16 %v145
    %v585 = vunpack.c.l.b16 %v146
    %v586 = vunpack.c.h.b16 %v146
    %v587 = vunpack.c.l.b16 %v147
    %v588 = vunpack.c.h.b16 %v147
    %v589 = vunpack.c.l.b16 %v148
    %v590 = vunpack.c.h.b16 %v148
    %v591 = vunpack.c.l.b16 %v149
    %v592 = vunpack.c.h.b16 %v149
    %v593 = vunpack.c.l.b16 %v150
    %v594 = vunpack.c.h.b16 %v150
    %v595 = vunpack.c.l.b16 %v151
    %v596 = vunpack.c.h.b16 %v151
    %v597 = vunpack.c.l.b16 %v152
    %v598 = vunpack.c.h.b16 %v152
    %v599 = vunpack.c.l.b16 %v153
    %v600 = vunpack.c.h.b16 %v153
    %v601 = vunpack.c.l.b16 %v154
    %v602 = vunpack.c.h.b16 %v154
    %v603 = vunpack.c.l.b16 %v155
    %v604 = vunpack.c.h.b16 %v155
    %v605 = vunpack.c.l.b16 %v156
    %v606 = vunpack.c.h.b16 %v156
    %v607 = vunpack.c.l.b16 %v157
    %v608 = vunpack.c.h.b16 %v157
    %v609 = vunpack.c.l.b16 %v158
    %v610 = vunpack.c.h.b16 %v158
    %v611 = vunpack.c.l.b16 %v159
    %v612 = vunpack.c.h.b16 %v159
    %v613 = vunpack.c.l.b16 %v160
    %v614 = vunpack.c.h.b16 %v160
    %v615 = vunpack.c.l.b16 %v161
    %v616 = vunpack.c.h.b16 %v161
    %v617 = vunpack.c.l.b16 %v162
    %v618 = vunpack.c.h.b16 %v162
    %v619 = vunpack.c.l.b16 %v163
    %v620 = vunpack.c.h.b16 %v163
    %v621 = vunpack.c.l.b16 %v164
    %v622 = vunpack.c.h.b16 %v164
    %v623 = vunpack.c.l.b16 %v165
    %v624 = vunpack.c.h.b16 %v165
    %v625 = vunpack.c.l.b16 %v166
    %v626 = vunpack.c.h.b16 %v166
    %v627 = vunpack.c.l.b16 %v167
    %v628 = vunpack.c.h.b16 %v167
    %v629 = vunpack.c.l.b16 %v168
    %v630 = vunpack.c.h.b16 %v168
    %v631 = vunpack.c.l.b16 %v169
    %v632 = vunpack.c.h.b16 %v169
    %v633 = vunpack.c.l.b16 %v170
    %v634 = vunpack.c.h.b16 %v170
    %v635 = vunpack.c.l.b16 %v171
    %v636 = vunpack.c.h.b16 %v171
    %v637 = vunpack.c.l.b16 %v172
    %v638 = vunpack.c.h.b16 %v172
    %v639 = vunpack.c.l.b16 %v173
    %v640 = vunpack.c.h.b16 %v173
    %v641 = vunpack.c.l.b16 %v174
    %v642 = vunpack.c.h.b16 %v174
    %v643 = vunpack.c.l.b16 %v175
    %v644 = vunpack.c.h.b16 %v175
    %v645 = vunpack.c.l.b16 %v176
    %v646 = vunpack.c.h.b16 %v176
    %v647 = vunpack.c.l.b16 %v177
    %v648 = vunpack.c.h.b16 %v177
    %v649 = vunpack.c.l.b16 %v178
    %v650 = vunpack.c.h.b16 %v178
    %v651 = vunpack.c.l.b16 %v179
    %v652 = vunpack.c.h.b16 %v179
    %v653 = vunpack.c.l.b16 %v180
    %v654 = vunpack.c.h.b16 %v180
    %v655 = vunpack.c.l.b16 %v181
    %v656 = vunpack.c.h.b16 %v181
    %v657 = vunpack.c.l.b16 %v182
    %v658 = vunpack.c.h.b16 %v182
    %v659 = vunpack.c.l.b16 %v183
    %v660 = vunpack.c.h.b16 %v183
    %v661 = vunpack.c.l.b16 %v184
    %v662 = vunpack.c.h.b16 %v184
    %v663 = vunpack.c.l.b16 %v185
    %v664 = vunpack.c.h.b16 %v185
    %v665 = vunpack.c.l.b16 %v186
    %v666 = vunpack.c.h.b16 %v186
    %v667 = vunpack.c.l.b16 %v187
    %v668 = vunpack.c.h.b16 %v187
    %v669 = vunpack.c.l.b16 %v188
    %v670 = vunpack.c.h.b16 %v188
    %v671 = vunpack.c.l.b16 %v189
    %v672 = vunpack.c.h.b16 %v189
    %v673 = vunpack.c.l.b16 %v190
    %v674 = vunpack.c.h.b16 %v190
    %v675 = vunpack.c.l.b16 %v191
    %v676 = vunpack.c.h.b16 %v191
    %v677 = vunpack.c.l.b16 %v192
    %v678 = vunpack.c.h.b16 %v192
    %v679 = vunpack.c.l.b16 %v193
    %v680 = vunpack.c.h.b16 %v193
    %v681 = vunpack.c.l.b16 %v194
    %v682 = vunpack.c.h.b16 %v194
    %v683 = vunpack.c.l.b16 %v195
    %v684 = vunpack.c.h.b16 %v195
    %v685 = vunpack.c.l.b16 %v196
    %v686 = vunpack.c.h.b16 %v196
    %v687 = vunpack.c.l.b16 %v197
    %v688 = vunpack.c.h.b16 %v197
    %v689 = vunpack.c.l.b16 %v198
    %v690 = vunpack.c.h.b16 %v198
    %v691 = vunpack.c.l.b16 %v199
    %v692 = vunpack.c.h.b16 %v199
    %v693 = vunpack.c.l.b16 %v200
    %v694 = vunpack.c.h.b16 %v200
    %v695 = vunpack.c.l.b16 %v201
    %v696 = vunpack.c.h.b16 %v201
    %v697 = vunpack.c.l.b16 %v202
    %v698 = vunpack.c.h.b16 %v202
    %v699 = vunpack.c.l.b16 %v203
    %v700 = vunpack.c.h.b16 %v203
    %v701 = vunpack.c.l.b16 %v204
    %v702 = vunpack.c.h.b16 %v204
    %v703 = vunpack.c.l.b16 %v205
    %v704 = vunpack.c.h.b16 %v205
    %v705 = vunpack.c.l.b16 %v206
    %v706 = vunpack.c.h.b16 %v206
    %v707 = vunpack.c.l.b16 %v207
    %v708 = vunpack.c.h.b16 %v207
    %v709 = vunpack.c.l.b16 %v208
    %v710 = vunpack.c.h.b16 %v208
    %v711 = vunpack.c.l.b16 %v209
    %v712 = vunpack.c.h.b16 %v209
    %v713 = vunpack.c.l.b16 %v210
    %v714 = vunpack.c.h.b16 %v210
    %v715 = vunpack.c.l.b16 %v211
    %v716 = vunpack.c.h.b16 %v211
    %v717 = vunpack.c.l.b16 %v212
    %v718 = vunpack.c.h.b16 %v212
    %v719 = vunpack.c.l.b16 %v213
    %v720 = vunpack.c.h.b16 %v213
    %v721 = vunpack.c.l.b16 %v214
    %v722 = vunpack.c.h.b16 %v214
    %v723 = vunpack.c.l.b16 %v215
    %v724 = vunpack.c.h.b16 %v215
    %v725 = vunpack.c.l.b16 %v216
    %v726 = vunpack.c.h.b16 %v216
    %v727 = vunpack.c.l.b16 %v217
    %v728 = vunpack.c.h.b16 %v217
    %v729 = vunpack.c.l.b16 %v218
    %v730 = vunpack.c.h.b16 %v218
    %v731 = vunpack.c.l.b16 %v219
    %v732 = vunpack.c.h.b16 %v219
    %v733 = vunpack.c.l.b16 %v220
    %v734 = vunpack.c.h.b16 %v220
    %v735 = vunpack.c.l.b16 %v221
    %v736 = vunpack.c.h.b16 %v221
    %v737 = vunpack.c.l.b16 %v222
    %v738 = vunpack.c.h.b16 %v222
    %v739 = vunpack.c.l.b16 %v223
    %v740 = vunpack.c.h.b16 %v223
    %v741 = vunpack.c.l.b16 %v224
    %v742 = vunpack.c.h.b16 %v224
    %v743 = vunpack.c.l.b16 %v225
    %v744 = vunpack.c.h.b16 %v225
    %v745 = vunpack.c.l.b16 %v226
    %v746 = vunpack.c.h.b16 %v226
    %v747 = vunpack.c.l.b16 %v227
    %v748 = vunpack.c.h.b16 %v227
    %v749 = vunpack.c.l.b16 %v228
    %v750 = vunpack.c.h.b16 %v228
    %v751 = vunpack.c.l.b16 %v229
    %v752 = vunpack.c.h.b16 %v229
    %v753 = vunpack.c.l.b16 %v230
    %v754 = vunpack.c.h.b16 %v230
    %v755 = vunpack.c.l.b16 %v231
    %v756 = vunpack.c.h.b16 %v231
    %v757 = vunpack.c.l.b16 %v232
    %v758 = vunpack.c.h.b16 %v232
    %v759 = vunpack.c.l.b16 %v233
    %v760 = vunpack.c.h.b16 %v233
    %v761 = vunpack.c.l.b16 %v234
    %v762 = vunpack.c.h.b16 %v234
    %v763 = vunpack.c.l.b16 %v235
    %v764 = vunpack.c.h.b16 %v235
    %v765 = vunpack.c.l.b16 %v236
    %v766 = vunpack.c.h.b16 %v236
    %v767 = vunpack.c.l.b16 %v237
    %v768 = vunpack.c.h.b16 %v237
    %v769 = vunpack.c.l.b16 %v238
    %v770 = vunpack.c.h.b16 %v238
    %v771 = vunpack.c.l.b16 %v239
    %v772 = vunpack.c.h.b16 %v239
    %v773 = vunpack.c.l.b16 %v240
    %v774 = vunpack.c.h.b16 %v240
    %v775 = vunpack.c.l.b16 %v241
    %v776 = vunpack.c.h.b16 %v241
    %v777 = vunpack.c.l.b16 %v242
    %v778 = vunpack.c.h.b16 %v242
    %v779 = vunpack.c.l.b16 %v243
    %v780 = vunpack.c.h.b16 %v243
    %v781 = vunpack.c.l.b16 %v244
    %v782 = vunpack.c.h.b16 %v244
    %v783 = vunpack.c.l.b16 %v245
    %v784 = vunpack.c.h.b16 %v245
    %v785 = vunpack.c.l.b16 %v246
    %v786 = vunpack.c.h.b16 %v246
    %v787 = vunpack.c.l.b16 %v247
    %v788 = vunpack.c.h.b16 %v247
    %v789 = vunpack.c.l.b16 %v248
    %v790 = vunpack.c.h.b16 %v248
    %v791 = vunpack.c.l.b16 %v249
    %v792 = vunpack.c.h.b16 %v249
    %v793 = vunpack.c.l.b16 %v250
    %v794 = vunpack.c.h.b16 %v250
    %v795 = vunpack.c.l.b16 %v251
    %v796 = vunpack.c.h.b16 %v251
    %v797 = vunpack.c.l.b16 %v252
    %v798 = vunpack.c.h.b16 %v252
    %v799 = vunpack.c.l.b16 %v253
    %v800 = vunpack.c.h.b16 %v253
    %v801 = vunpack.c.l.b16 %v254
    %v802 = vunpack.c.h.b16 %v254
    %v803 = vunpack.c.l.b16 %v255
    %v804 = vunpack.c.h.b16 %v255
    %v805 = vunpack.c.l.b16 %v256
    %v806 = vunpack.c.h.b16 %v256
    %v807 = vunpack.c.l.b16 %v257
    %v808 = vunpack.c.h.b16 %v257
    %v809 = vunpack.c.l.b16 %v258
    %v810 = vunpack.c.h.b16 %v258
    %v811 = vunpack.c.l.b16 %v259
    %v812 = vunpack.c.h.b16 %v259
    %v813 = vunpack.c.l.b16 %v260
    %v814 = vunpack.c.h.b16 %v260
    %v815 = vunpack.c.l.b16 %v261
    %v816 = vunpack.c.h.b16 %v261
    %v817 = vunpack.c.l.b16 %v262
    %v818 = vunpack.c.h.b16 %v262
    %v819 = vunpack.c.l.b16 %v263
    %v820 = vunpack.c.h.b16 %v263
    %v821 = vunpack.c.l.b16 %v264
    %v822 = vunpack.c.h.b16 %v264
    %v823 = vunpack.c.l.b16 %v265
    %v824 = vunpack.c.h.b16 %v265
    %v825 = vunpack.c.l.b16 %v266
    %v826 = vunpack.c.h.b16 %v266
    %v827 = vunpack.c.l.b16 %v267
    %v828 = vunpack.c.h.b16 %v267
    %v829 = vunpack.c.l.b16 %v268
    %v830 = vunpack.c.h.b16 %v268
    %v831 = vunpack.c.l.b16 %v269
    %v832 = vunpack.c.h.b16 %v269
    %v833 = vunpack.c.l.b16 %v270
    %v834 = vunpack.c.h.b16 %v270
    %v835 = vunpack.c.l.b16 %v271
    %v836 = vunpack.c.h.b16 %v271
    %v837 = vunpack.c.l.b16 %v272
    %v838 = vunpack.c.h.b16 %v272
    %v839 = vunpack.c.l.b16 %v273
    %v840 = vunpack.c.h.b16 %v273
    %v841 = vunpack.c.l.b16 %v274
    %v842 = vunpack.c.h.b16 %v274
    %v843 = vunpack.c.l.b16 %v275
    %v844 = vunpack.c.h.b16 %v275
    %v845 = vunpack.c.l.b16 %v276
    %v846 = vunpack.c.h.b16 %v276
    %v847 = vunpack.c.l.b16 %v277
    %v848 = vunpack.c.h.b16 %v277
    %v849 = vunpack.c.l.b16 %v278
    %v850 = vunpack.c.h.b16 %v278
    %v851 = vunpack.c.l.b16 %v279
    %v852 = vunpack.c.h.b16 %v279
    %v853 = vunpack.c.l.b16 %v280
    %v854 = vunpack.c.h.b16 %v280
    %v855 = vunpack.c.l.b16 %v281
    %v856 = vunpack.c.h.b16 %v281
    %v857 = vunpack.c.l.b16 %v282
    %v858 = vunpack.c.h.b16 %v282
    %v859 = vunpack.c.l.b16 %v283
    %v860 = vunpack.c.h.b16 %v283
    %v861 = vunpack.c.l.b16 %v284
    %v862 = vunpack.c.h.b16 %v284
    %v863 = vunpack.c.l.b16 %v285
    %v864 = vunpack.c.h.b16 %v285
    %v865 = vunpack.c.l.b16 %v286
    %v866 = vunpack.c.h.b16 %v286
    %v867 = vunpack.c.l.b16 %v287
    %v868 = vunpack.c.h.b16 %v287
    %v869 = vunpack.c.l.b16 %v288
    %v870 = vunpack.c.h.b16 %v288
    %v871 = vunpack.c.l.b16 %v289
    %v872 = vunpack.c.h.b16 %v289
    %v873 = vpack.c.b16 %v501, %v489
    %v874 = vpack.c.b16 %v502, %v490
    %v875 = vpack.c.b16 %v503, %v491
    %v876 = vpack.c.b16 %v504, %v492
    %v877 = vpack.c.b16 %v505, %v493
    %v878 = vpack.c.b16 %v506, %v494
    %v879 = vpack.c.b16 %v507, %v495
    %v880 = vpack.c.b16 %v508, %v496
    %v881 = vpack.c.b16 %v509, %v497
    %v882 = vpack.c.b16 %v510, %v498
    %v883 = vpack.c.b16 %v511, %v499
    %v884 = vpack.c.b16 %v512, %v500
    %v885 = vpack.c.b16 %v525, %v513
    %v886 = vpack.c.b16 %v526, %v514
    %v887 = vpack.c.b16 %v527, %v515
    %v888 = vpack.c.b16 %v528, %v516
    %v889 = vpack.c.b16 %v529, %v517
    %v890 = vpack.c.b16 %v530, %v518
    %v891 = vpack.c.b16 %v531, %v519
    %v892 = vpack.c.b16 %v532, %v520
    %v893 = vpack.c.b16 %v533, %v521
    %v894 = vpack.c.b16 %v534, %v522
    %v895 = vpack.c.b16 %v535, %v523
    %v896 = vpack.c.b16 %v536, %v524
    %v897 = vpack.c.b16 %v549, %v537
    %v898 = vpack.c.b16 %v550, %v538
    %v899 = vpack.c.b16 %v551, %v539
    %v900 = vpack.c.b16 %v552, %v540
    %v901 = vpack.c.b16 %v553, %v541
    %v902 = vpack.c.b16 %v554, %v542
    %v903 = vpack.c.b16 %v555, %v543
    %v904 = vpack.c.b16 %v556, %v544
    %v905 = vpack.c.b16 %v557, %v545
    %v906 = vpack.c.b16 %v558, %v546
    %v907 = vpack.c.b16 %v559, %v547
    %v908 = vpack.c.b16 %v560, %v548
    %v909 = vpack.c.b16 %v573, %v561
    %v910 = vpack.c.b16 %v574, %v562
    %v911 = vpack.c.b16 %v575, %v563
    %v912 = vpack.c.b16 %v576, %v564
    %v913 = vpack.c.b16 %v577, %v565
    %v914 = vpack.c.b16 %v578, %v566
    %v915 = vpack.c.b16 %v579, %v567
    %v916 = vpack.c.b16 %v580, %v568
    %v917 = vpack.c.b16 %v581, %v569
    %v918 = vpack.c.b16 %v582, %v570
    %v919 = vpack.c.b16 %v583, %v571
    %v920 = vpack.c.b16 %v584, %v572
    %v921 = vpack.c.b16 %v597, %v585
    %v922 = vpack.c.b16 %v598, %v586
    %v923 = vpack.c.b16 %v599, %v587
    %v924 = vpack.c.b16 %v600, %v588
    %v925 = vpack.c.b16 %v601, %v589
    %v926 = vpack.c.b16 %v602, %v590
    %v927 = vpack.c.b16 %v603, %v591
    %v928 = vpack.c.b16 %v604, %v592
    %v929 = vpack.c.b16 %v605, %v593
    %v930 = vpack.c.b16 %v606, %v594
    %v931 = vpack.c.b16 %v607, %v595
    %v932 = vpack.c.b16 %v608, %v596
    %v933 = vpack.c.b16 %v621, %v609
    %v934 = vpack.c.b16 %v622, %v610
    %v935 = vpack.c.b16 %v623, %v611
    %v936 = vpack.c.b16 %v624, %v612
    %v937 = vpack.c.b16 %v625, %v613
    %v938 = vpack.c.b16 %v626, %v614
    %v939 = vpack.c.b16 %v627, %v615
    %v940 = vpack.c.b16 %v628, %v616
    %v941 = vpack.c.b16 %v629, %v617
    %v942 = vpack.c.b16 %v630, %v618
    %v943 = vpack.c.b16 %v631, %v619
    %v944 = vpack.c.b16 %v632, %v620
    %v945 = vpack.c.b16 %v645, %v633
    %v946 = vpack.c.b16 %v646, %v634
    %v947 = vpack.c.b16 %v647, %v635
    %v948 = vpack.c.b16 %v648, %v636
    %v949 = vpack.c.b16 %v649, %v637
    %v950 = vpack.c.b16 %v650, %v638
    %v951 = vpack.c.b16 %v651, %v639
    %v952 = vpack.c.b16 %v652, %v640
    %v953 = vpack.c.b16 %v653, %v641
    %v954 = vpack.c.b16 %v654, %v642
    %v955 = vpack.c.b16 %v655, %v643
    %v956 = vpack.c.b16 %v656, %v644
    %v957 = vpack.c.b16 %v669, %v657
    %v958 = vpack.c.b16 %v670, %v658
    %v959 = vpack.c.b16 %v671, %v659
    %v960 = vpack.c.b16 %v672, %v660
    %v961 = vpack.c.b16 %v673, %v661
    %v962 = vpack.c.b16 %v674, %v662
    %v963 = vpack.c.b16 %v675, %v663
    %v964 = vpack.c.b16 %v676, %v664
    %v965 = vpack.c.b16 %v677, %v665
    %v966 = vpack.c.b16 %v678, %v666
    %v967 = vpack.c.b16 %v679, %v667
    %v968 = vpack.c.b16 %v680, %v668
    %v969 = vpack.c.b16 %v693, %v681
    %v970 = vpack.c.b16 %v694, %v682
    %v971 = vpack.c.b16 %v695, %v683
    %v972 = vpack.c.b16 %v696, %v684
    %v973 = vpack.c.b16 %v697, %v685
    %v974 = vpack.c.b16 %v698, %v686
    %v975 = vpack.c.b16 %v699, %v687
    %v976 = vpack.c.b16 %v700, %v688
    %v977 = vpack.c.b16 %v701, %v689
    %v978 = vpack.c.b16 %v702, %v690
    %v979 = vpack.c.b16 %v703, %v691
    %v980 = vpack.c.b16 %v704, %v692
    %v981 = vpack.c.b16 %v717, %v705
    %v982 = vpack.c.b16 %v718, %v706
    %v983 = vpack.c.b16 %v719, %v707
    %v984 = vpack.c.b16 %v720, %v708
    %v985 = vpack.c.b16 %v721, %v709
    %v986 = vpack.c.b16 %v722, %v710
    %v987 = vpack.c.b16 %v723, %v711
    %v988 = vpack.c.b16 %v724, %v712
    %v989 = vpack.c.b16 %v725, %v713
    %v990 = vpack.c.b16 %v726, %v714
    %v991 = vpack.c.b16 %v727, %v715
    %v992 = vpack.c.b16 %v728, %v716
    %v993 = vpack.c.b16 %v741, %v729
    %v994 = vpack.c.b16 %v742, %v730
    %v995 = vpack.c.b16 %v743, %v731
    %v996 = vpack.c.b16 %v744, %v732
    %v997 = vpack.c.b16 %v745, %v733
    %v998 = vpack.c.b16 %v746, %v734
    %v999 = vpack.c.b16 %v747, %v735
    %v1000 = vpack.c.b16 %v748, %v736
    %v1001 = vpack.c.b16 %v749, %v737
    %v1002 = vpack.c.b16 %v750, %v738
    %v1003 = vpack.c.b16 %v751, %v739
    %v1004 = vpack.c.b16 %v752, %v740
    %v1005 = vpack.c.b16 %v765, %v753
    %v1006 = vpack.c.b16 %v766, %v754
    %v1007 = vpack.c.b16 %v767, %v755
    %v1008 = vpack.c.b16 %v768, %v756
    %v1009 = vpack.c.b16 %v769, %v757
    %v1010 = vpack.c.b16 %v770, %v758
    %v1011 = vpack.c.b16 %v771, %v759
    %v1012 = vpack.c.b16 %v772, %v760
    %v1013 = vpack.c.b16 %v773, %v761
    %v1014 = vpack.c.b16 %v774, %v762
    %v1015 = vpack.c.b16 %v775, %v763
    %v1016 = vpack.c.b16 %v776, %v764
    %v1017 = vpack.c.b16 %v789, %v777
    %v1018 = vpack.c.b16 %v790, %v778
    %v1019 = vpack.c.b16 %v791, %v779
    %v1020 = vpack.c.b16 %v792, %v780
    %v1021 = vpack.c.b16 %v793, %v781
    %v1022 = vpack.c.b16 %v794, %v782
    %v1023 = vpack.c.b16 %v795, %v783
    %v1024 = vpack.c.b16 %v796, %v784
    %v1025 = vpack.c.b16 %v797, %v785
    %v1026 = vpack.c.b16 %v798, %v786
    %v1027 = vpack.c.b16 %v799, %v787
    %v1028 = vpack.c.b16 %v800, %v788
    %v1029 = vpack.c.b16 %v813, %v801
    %v1030 = vpack.c.b16 %v814, %v802
    %v1031 = vpack.c.b16 %v815, %v803
    %v1032 = vpack.c.b16 %v816, %v804
    %v1033 = vpack.c.b16 %v817, %v805
    %v1034 = vpack.c.b16 %v818, %v806
    %v1035 = vpack.c.b16 %v819, %v807
    %v1036 = vpack.c.b16 %v820, %v808
    %v1037 = vpack.c.b16 %v821, %v809
    %v1038 = vpack.c.b16 %v822, %v810
    %v1039 = vpack.c.b16 %v823, %v811
    %v1040 = vpack.c.b16 %v824, %v812
    %v1041 = vpack.c.b16 %v837, %v825
    %v1042 = vpack.c.b16 %v838, %v826
    %v1043 = vpack.c.b16 %v839, %v827
    %v1044 = vpack.c.b16 %v840, %v828
    %v1045 = vpack.c.b16 %v841, %v829
    %v1046 = vpack.c.b16 %v842, %v830
    %v1047 = vpack.c.b16 %v843, %v831
    %v1048 = vpack.c.b16 %v844, %v832
    %v1049 = vpack.c.b16 %v845, %v833
    %v1050 = vpack.c.b16 %v846, %v834
    %v1051 = vpack.c.b16 %v847, %v835
    %v1052 = vpack.c.b16 %v848, %v836
    %v1053 = vpack.c.b16 %v861, %v849
    %v1054 = vpack.c.b16 %v862, %v850
    %v1055 = vpack.c.b16 %v863, %v851
    %v1056 = vpack.c.b16 %v864, %v852
    %v1057 = vpack.c.b16 %v865, %v853
    %v1058 = vpack.c.b16 %v866, %v854
    %v1059 = vpack.c.b16 %v867, %v855
    %v1060 = vpack.c.b16 %v868, %v856
    %v1061 = vpack.c.b16 %v869, %v857
    %v1062 = vpack.c.b16 %v870, %v858
    %v1063 = vpack.c.b16 %v871, %v859
    %v1064 = vpack.c.b16 %v872, %v860
    %1257 = vmatprep.subr.bf16.mxu0 %v958
    %1258 = vmatpush1.bf16.msra.mxu0 %v957
    %1259 = vmatprep.subr.bf16.mxu0 %v946
    %1260 = vmatpush1.bf16.msra.mxu0 %v945
    %1261 = vmatprep.subr.bf16.mxu0 %v934
    %1262 = vmatpush1.bf16.msra.mxu0 %v933
    %1263 = vmatprep.subr.bf16.mxu0 %v922
    %1264 = vmatpush1.bf16.msra.mxu0 %v921
    %1265 = vmatprep.subr.bf16.mxu0 %v910
    %1266 = vmatpush1.bf16.msra.mxu0 %v909
    %1267 = vmatprep.subr.bf16.mxu0 %v898
    %1268 = vmatpush1.bf16.msra.mxu0 %v897
    %1269 = vmatprep.subr.bf16.mxu0 %v886
    %1270 = vmatpush1.bf16.msra.mxu0 %v885
    %1271 = vmatprep.subr.bf16.mxu0 %v874
    %1272 = vmatpush1.bf16.msra.mxu0 %v873
    %1273 = vmatprep.subr.bf16.mxu0 %v1054
    %1274 = vmatpush2.bf16.msra.mxu0 %v1053
    %1275 = vmatprep.subr.bf16.mxu0 %v1042
    %1276 = vmatpush2.bf16.msra.mxu0 %v1041
    %1277 = vmatprep.subr.bf16.mxu0 %v1030
    %1278 = vmatpush2.bf16.msra.mxu0 %v1029
    %1279 = vmatprep.subr.bf16.mxu0 %v1018
    %1280 = vmatpush2.bf16.msra.mxu0 %v1017
    %1281 = vmatprep.subr.bf16.mxu0 %v1006
    %1282 = vmatpush2.bf16.msra.mxu0 %v1005
    %1283 = vmatprep.subr.bf16.mxu0 %v994
    %1284 = vmatpush2.bf16.msra.mxu0 %v993
    %1285 = vmatprep.subr.bf16.mxu0 %v982
    %1286 = vmatpush2.bf16.msra.mxu0 %v981
    %1287 = vmatprep.subr.bf16.mxu0 %v970
    %1288 = vmatpush2.bf16.msra.mxu0 %v969
    %1289 = vmatprep.mubr.bf16.mxu0 %v294
    %1290 = vmatmul.mubr.bf16.gmra.mxu0 %v293
    %v1291 = vpop.f32.mrf.mxu0
    %v1292 = vadd.f32 0.0, %v1291
    %v1293 = vpop.f32.mrf.mxu0
    %v1294 = vadd.f32 0.0, %v1293
    %v1295 = vpop.f32.mrf.mxu0
    %v1296 = vpop.f32.mrf.mxu0
    %1297 = vdwg.mxu0
    %1298 = vmatprep.subr.bf16.mxu0 %v960
    %1299 = vmatpush1.bf16.msra.mxu0 %v959
    %1300 = vmatprep.subr.bf16.mxu0 %v948
    %1301 = vmatpush1.bf16.msra.mxu0 %v947
    %1302 = vmatprep.subr.bf16.mxu0 %v936
    %1303 = vmatpush1.bf16.msra.mxu0 %v935
    %1304 = vmatprep.subr.bf16.mxu0 %v924
    %1305 = vmatpush1.bf16.msra.mxu0 %v923
    %1306 = vmatprep.subr.bf16.mxu0 %v912
    %1307 = vmatpush1.bf16.msra.mxu0 %v911
    %1308 = vmatprep.subr.bf16.mxu0 %v900
    %1309 = vmatpush1.bf16.msra.mxu0 %v899
    %1310 = vmatprep.subr.bf16.mxu0 %v888
    %1311 = vmatpush1.bf16.msra.mxu0 %v887
    %1312 = vmatprep.subr.bf16.mxu0 %v876
    %1313 = vmatpush1.bf16.msra.mxu0 %v875
    %1314 = vmatprep.subr.bf16.mxu0 %v1056
    %1315 = vmatpush2.bf16.msra.mxu0 %v1055
    %1316 = vmatprep.subr.bf16.mxu0 %v1044
    %1317 = vmatpush2.bf16.msra.mxu0 %v1043
    %1318 = vmatprep.subr.bf16.mxu0 %v1032
    %1319 = vmatpush2.bf16.msra.mxu0 %v1031
    %1320 = vmatprep.subr.bf16.mxu0 %v1020
    %1321 = vmatpush2.bf16.msra.mxu0 %v1019
    %1322 = vmatprep.subr.bf16.mxu0 %v1008
    %1323 = vmatpush2.bf16.msra.mxu0 %v1007
    %1324 = vmatprep.subr.bf16.mxu0 %v996
    %1325 = vmatpush2.bf16.msra.mxu0 %v995
    %1326 = vmatprep.subr.bf16.mxu0 %v984
    %1327 = vmatpush2.bf16.msra.mxu0 %v983
    %1328 = vmatprep.subr.bf16.mxu0 %v972
    %1329 = vmatpush2.bf16.msra.mxu0 %v971
    %1330 = vmatprep.mubr.bf16.mxu0 %v294
    %1331 = vmatmul.mubr.bf16.gmra.mxu0 %v293
    %v1332 = vpop.f32.mrf.mxu0
    %v1333 = vadd.f32 0.0, %v1332
    %v1334 = vpop.f32.mrf.mxu0
    %v1335 = vadd.f32 0.0, %v1334
    %v1336 = vpop.f32.mrf.mxu0
    %v1337 = vpop.f32.mrf.mxu0
    %1338 = vdwg.mxu0
    %1339 = vmatprep.subr.bf16.mxu0 %v962
    %1340 = vmatpush1.bf16.msra.mxu0 %v961
    %1341 = vmatprep.subr.bf16.mxu0 %v950
    %1342 = vmatpush1.bf16.msra.mxu0 %v949
    %1343 = vmatprep.subr.bf16.mxu0 %v938
    %1344 = vmatpush1.bf16.msra.mxu0 %v937
    %1345 = vmatprep.subr.bf16.mxu0 %v926
    %1346 = vmatpush1.bf16.msra.mxu0 %v925
    %1347 = vmatprep.subr.bf16.mxu0 %v914
    %1348 = vmatpush1.bf16.msra.mxu0 %v913
    %1349 = vmatprep.subr.bf16.mxu0 %v902
    %1350 = vmatpush1.bf16.msra.mxu0 %v901
    %1351 = vmatprep.subr.bf16.mxu0 %v890
    %1352 = vmatpush1.bf16.msra.mxu0 %v889
    %1353 = vmatprep.subr.bf16.mxu0 %v878
    %1354 = vmatpush1.bf16.msra.mxu0 %v877
    %1355 = vmatprep.subr.bf16.mxu0 %v1058
    %1356 = vmatpush2.bf16.msra.mxu0 %v1057
    %1357 = vmatprep.subr.bf16.mxu0 %v1046
    %1358 = vmatpush2.bf16.msra.mxu0 %v1045
    %1359 = vmatprep.subr.bf16.mxu0 %v1034
    %1360 = vmatpush2.bf16.msra.mxu0 %v1033
    %1361 = vmatprep.subr.bf16.mxu0 %v1022
    %1362 = vmatpush2.bf16.msra.mxu0 %v1021
    %1363 = vmatprep.subr.bf16.mxu0 %v1010
    %1364 = vmatpush2.bf16.msra.mxu0 %v1009
    %1365 = vmatprep.subr.bf16.mxu0 %v998
    %1366 = vmatpush2.bf16.msra.mxu0 %v997
    %1367 = vmatprep.subr.bf16.mxu0 %v986
    %1368 = vmatpush2.bf16.msra.mxu0 %v985
    %1369 = vmatprep.subr.bf16.mxu0 %v974
    %1370 = vmatpush2.bf16.msra.mxu0 %v973
    %1371 = vmatprep.mubr.bf16.mxu0 %v294
    %1372 = vmatmul.mubr.bf16.gmra.mxu0 %v293
    %v1373 = vpop.f32.mrf.mxu0
    %v1374 = vadd.f32 0.0, %v1373
    %v1375 = vpop.f32.mrf.mxu0
    %v1376 = vadd.f32 0.0, %v1375
    %v1377 = vpop.f32.mrf.mxu0
    %v1378 = vpop.f32.mrf.mxu0
    %1379 = vdwg.mxu0
    %1380 = vmatprep.subr.bf16.mxu0 %v964
    %1381 = vmatpush1.bf16.msra.mxu0 %v963
    %1382 = vmatprep.subr.bf16.mxu0 %v952
    %1383 = vmatpush1.bf16.msra.mxu0 %v951
    %1384 = vmatprep.subr.bf16.mxu0 %v940
    %1385 = vmatpush1.bf16.msra.mxu0 %v939
    %1386 = vmatprep.subr.bf16.mxu0 %v928
    %1387 = vmatpush1.bf16.msra.mxu0 %v927
    %1388 = vmatprep.subr.bf16.mxu0 %v916
    %1389 = vmatpush1.bf16.msra.mxu0 %v915
    %1390 = vmatprep.subr.bf16.mxu0 %v904
    %1391 = vmatpush1.bf16.msra.mxu0 %v903
    %1392 = vmatprep.subr.bf16.mxu0 %v892
    %1393 = vmatpush1.bf16.msra.mxu0 %v891
    %1394 = vmatprep.subr.bf16.mxu0 %v880
    %1395 = vmatpush1.bf16.msra.mxu0 %v879
    %1396 = vmatprep.subr.bf16.mxu0 %v1060
    %1397 = vmatpush2.bf16.msra.mxu0 %v1059
    %1398 = vmatprep.subr.bf16.mxu0 %v1048
    %1399 = vmatpush2.bf16.msra.mxu0 %v1047
    %1400 = vmatprep.subr.bf16.mxu0 %v1036
    %1401 = vmatpush2.bf16.msra.mxu0 %v1035
    %1402 = vmatprep.subr.bf16.mxu0 %v1024
    %1403 = vmatpush2.bf16.msra.mxu0 %v1023
    %1404 = vmatprep.subr.bf16.mxu0 %v1012
    %1405 = vmatpush2.bf16.msra.mxu0 %v1011
    %1406 = vmatprep.subr.bf16.mxu0 %v1000
    %1407 = vmatpush2.bf16.msra.mxu0 %v999
    %1408 = vmatprep.subr.bf16.mxu0 %v988
    %1409 = vmatpush2.bf16.msra.mxu0 %v987
    %1410 = vmatprep.subr.bf16.mxu0 %v976
    %1411 = vmatpush2.bf16.msra.mxu0 %v975
    %1412 = vmatprep.mubr.bf16.mxu0 %v294
    %1413 = vmatmul.mubr.bf16.gmra.mxu0 %v293
    %v1414 = vpop.f32.mrf.mxu0
    %v1415 = vadd.f32 0.0, %v1414
    %v1416 = vpop.f32.mrf.mxu0
    %v1417 = vadd.f32 0.0, %v1416
    %v1418 = vpop.f32.mrf.mxu0
    %v1419 = vpop.f32.mrf.mxu0
    %1420 = vdwg.mxu0
    %1421 = vmatprep.subr.bf16.mxu0 %v966
    %1422 = vmatpush1.bf16.msra.mxu0 %v965
    %1423 = vmatprep.subr.bf16.mxu0 %v954
    %1424 = vmatpush1.bf16.msra.mxu0 %v953
    %1425 = vmatprep.subr.bf16.mxu0 %v942
    %1426 = vmatpush1.bf16.msra.mxu0 %v941
    %1427 = vmatprep.subr.bf16.mxu0 %v930
    %1428 = vmatpush1.bf16.msra.mxu0 %v929
    %1429 = vmatprep.subr.bf16.mxu0 %v918
    %1430 = vmatpush1.bf16.msra.mxu0 %v917
    %1431 = vmatprep.subr.bf16.mxu0 %v906
    %1432 = vmatpush1.bf16.msra.mxu0 %v905
    %1433 = vmatprep.subr.bf16.mxu0 %v894
    %1434 = vmatpush1.bf16.msra.mxu0 %v893
    %1435 = vmatprep.subr.bf16.mxu0 %v882
    %1436 = vmatpush1.bf16.msra.mxu0 %v881
    %1437 = vmatprep.subr.bf16.mxu0 %v1062
    %1438 = vmatpush2.bf16.msra.mxu0 %v1061
    %1439 = vmatprep.subr.bf16.mxu0 %v1050
    %1440 = vmatpush2.bf16.msra.mxu0 %v1049
    %1441 = vmatprep.subr.bf16.mxu0 %v1038
    %1442 = vmatpush2.bf16.msra.mxu0 %v1037
    %1443 = vmatprep.subr.bf16.mxu0 %v1026
    %1444 = vmatpush2.bf16.msra.mxu0 %v1025
    %1445 = vmatprep.subr.bf16.mxu0 %v1014
    %1446 = vmatpush2.bf16.msra.mxu0 %v1013
    %1447 = vmatprep.subr.bf16.mxu0 %v1002
    %1448 = vmatpush2.bf16.msra.mxu0 %v1001
    %1449 = vmatprep.subr.bf16.mxu0 %v990
    %1450 = vmatpush2.bf16.msra.mxu0 %v989
    %1451 = vmatprep.subr.bf16.mxu0 %v978
    %1452 = vmatpush2.bf16.msra.mxu0 %v977
    %1453 = vmatprep.mubr.bf16.mxu0 %v294
    %1454 = vmatmul.mubr.bf16.gmra.mxu0 %v293
    %v1455 = vpop.f32.mrf.mxu0
    %v1456 = vadd.f32 0.0, %v1455
    %v1457 = vpop.f32.mrf.mxu0
    %v1458 = vadd.f32 0.0, %v1457
    %v1459 = vpop.f32.mrf.mxu0
    %v1460 = vpop.f32.mrf.mxu0
    %1461 = vdwg.mxu0
    %1462 = vmatprep.subr.bf16.mxu0 %v968
    %1463 = vmatpush1.bf16.msra.mxu0 %v967
    %1464 = vmatprep.subr.bf16.mxu0 %v956
    %1465 = vmatpush1.bf16.msra.mxu0 %v955
    %1466 = vmatprep.subr.bf16.mxu0 %v944
    %1467 = vmatpush1.bf16.msra.mxu0 %v943
    %1468 = vmatprep.subr.bf16.mxu0 %v932
    %1469 = vmatpush1.bf16.msra.mxu0 %v931
    %1470 = vmatprep.subr.bf16.mxu0 %v920
    %1471 = vmatpush1.bf16.msra.mxu0 %v919
    %1472 = vmatprep.subr.bf16.mxu0 %v908
    %1473 = vmatpush1.bf16.msra.mxu0 %v907
    %1474 = vmatprep.subr.bf16.mxu0 %v896
    %1475 = vmatpush1.bf16.msra.mxu0 %v895
    %1476 = vmatprep.subr.bf16.mxu0 %v884
    %1477 = vmatpush1.bf16.msra.mxu0 %v883
    %1478 = vmatprep.subr.bf16.mxu0 %v1064
    %1479 = vmatpush2.bf16.msra.mxu0 %v1063
    %1480 = vmatprep.subr.bf16.mxu0 %v1052
    %1481 = vmatpush2.bf16.msra.mxu0 %v1051
    %1482 = vmatprep.subr.bf16.mxu0 %v1040
    %1483 = vmatpush2.bf16.msra.mxu0 %v1039
    %1484 = vmatprep.subr.bf16.mxu0 %v1028
    %1485 = vmatpush2.bf16.msra.mxu0 %v1027
    %1486 = vmatprep.subr.bf16.mxu0 %v1016
    %1487 = vmatpush2.bf16.msra.mxu0 %v1015
    %1488 = vmatprep.subr.bf16.mxu0 %v1004
    %1489 = vmatpush2.bf16.msra.mxu0 %v1003
    %1490 = vmatprep.subr.bf16.mxu0 %v992
    %1491 = vmatpush2.bf16.msra.mxu0 %v991
    %1492 = vmatprep.subr.bf16.mxu0 %v980
    %1493 = vmatpush2.bf16.msra.mxu0 %v979
    %1494 = vmatprep.mubr.bf16.mxu0 %v294
    %1495 = vmatmul.mubr.bf16.gmra.mxu0 %v293
    %v1496 = vpop.f32.mrf.mxu0
    %v1497 = vadd.f32 0.0, %v1496
    %v1498 = vpop.f32.mrf.mxu0
    %v1499 = vadd.f32 0.0, %v1498
    %v1500 = vpop.f32.mrf.mxu0
    %v1501 = vpop.f32.mrf.mxu0
    %1502 = vdwg.mxu0
    %v1503 = vld [vmem:[%s0] sm:$0xff]
    %v1504 = vld [vmem:[%s0 + $0x8] sm:$0xf]
    %v1507 = vlaneseq
    %v1508 = vshrl.u32 %v1507, 7
    %v1509 = vsub.s32 0, %v1508
    %v1510 = vrot.slane %v1503, %v1509
    %v1511 = vlaneseq
    %v1512 = vshrl.u32 %v1511, 7
    %v1513 = vsub.s32 1, %v1512
    %v1514 = vrot.slane %v1503, %v1513
    %v1515 = vlaneseq
    %v1516 = vshrl.u32 %v1515, 7
    %v1517 = vsub.s32 2, %v1516
    %v1518 = vrot.slane %v1503, %v1517
    %v1519 = vlaneseq
    %v1520 = vshrl.u32 %v1519, 7
    %v1521 = vsub.s32 3, %v1520
    %v1522 = vrot.slane %v1503, %v1521
    %v1523 = vlaneseq
    %v1524 = vshrl.u32 %v1523, 7
    %v1525 = vsub.s32 4, %v1524
    %v1526 = vrot.slane %v1503, %v1525
    %v1527 = vlaneseq
    %v1528 = vshrl.u32 %v1527, 7
    %v1529 = vsub.s32 5, %v1528
    %v1530 = vrot.slane %v1503, %v1529
    %v1531 = vlaneseq
    %v1532 = vshrl.u32 %v1531, 7
    %v1533 = vsub.s32 6, %v1532
    %v1534 = vrot.slane %v1503, %v1533
    %v1535 = vlaneseq
    %v1536 = vshrl.u32 %v1535, 7
    %v1537 = vsub.s32 7, %v1536
    %v1538 = vrot.slane %v1503, %v1537
    %v1539 = vlaneseq
    %v1540 = vshrl.u32 %v1539, 7
    %v1541 = vsub.s32 0, %v1540
    %v1542 = vrot.slane %v1504, %v1541
    %v1543 = vlaneseq
    %v1544 = vshrl.u32 %v1543, 7
    %v1545 = vsub.s32 1, %v1544
    %v1546 = vrot.slane %v1504, %v1545
    %v1547 = vlaneseq
    %v1548 = vshrl.u32 %v1547, 7
    %v1549 = vsub.s32 2, %v1548
    %v1550 = vrot.slane %v1504, %v1549
    %v1551 = vlaneseq
    %v1552 = vshrl.u32 %v1551, 7
    %v1553 = vsub.s32 3, %v1552
    %v1554 = vrot.slane %v1504, %v1553
    %v1567 = vadd.f32 %v1510, %v1292
    %v1568 = vadd.f32 %v1514, %v1294
    %v1569 = vadd.f32 %v1518, %v1333
    %v1570 = vadd.f32 %v1522, %v1335
    %v1571 = vadd.f32 %v1526, %v1374
    %v1572 = vadd.f32 %v1530, %v1376
    %v1573 = vadd.f32 %v1534, %v1415
    %v1574 = vadd.f32 %v1538, %v1417
    %v1575 = vadd.f32 %v1542, %v1456
    %v1576 = vadd.f32 %v1546, %v1458
    %v1577 = vadd.f32 %v1550, %v1497
    %v1578 = vadd.f32 %v1554, %v1499
    %v1579 = vld [vmem:[#allocation10] sm:$0xf]
    %v1580 = vld [vmem:[#allocation10 + $0x4] sm:$0xf]
    %v1581 = vld [vmem:[#allocation10 + $0x8] sm:$0xf]
    %v1582 = vld [vmem:[#allocation10 + $0xc] sm:$0xf]
    %v1583 = vld [vmem:[#allocation10 + $0x10] sm:$0xf]
    %v1584 = vld [vmem:[#allocation10 + $0x14] sm:$0xf]
    %v1585 = vld [vmem:[#allocation10 + $0x18] sm:$0xf]
    %v1586 = vld [vmem:[#allocation10 + $0x1c] sm:$0xf]
    %v1587 = vld [vmem:[#allocation10 + $0x20] sm:$0xf]
    %v1588 = vld [vmem:[#allocation10 + $0x24] sm:$0xf]
    %v1589 = vld [vmem:[#allocation10 + $0x28] sm:$0xf]
    %v1590 = vld [vmem:[#allocation10 + $0x2c] sm:$0xf]
    %v1591 = vld [vmem:[#allocation10 + $0x30] sm:$0xf]
    %v1592 = vld [vmem:[#allocation10 + $0x34] sm:$0xf]
    %v1593 = vld [vmem:[#allocation10 + $0x38] sm:$0xf]
    %v1594 = vld [vmem:[#allocation10 + $0x3c] sm:$0xf]
    %v1595 = vld [vmem:[#allocation5] sm:$0xff]
    %v1596 = vld [vmem:[#allocation5 + $0x8] sm:$0xff]
    %v1597 = vld [vmem:[#allocation5 + $0x10] sm:$0xff]
    %v1598 = vld [vmem:[#allocation5 + $0x18] sm:$0xff]
    %v1599 = vld [vmem:[#allocation5 + $0x20] sm:$0xff]
    %v1600 = vld [vmem:[#allocation5 + $0x28] sm:$0xff]
    %v1617 = vunpack.c.l.b16 %v1579
    %v1618 = vunpack.c.l.b16 %v1580
    %v1619 = vunpack.c.l.b16 %v1581
    %v1620 = vunpack.c.l.b16 %v1582
    %v1621 = vunpack.c.l.b16 %v1583
    %v1622 = vunpack.c.l.b16 %v1584
    %v1623 = vunpack.c.l.b16 %v1585
    %v1624 = vunpack.c.l.b16 %v1586
    %v1625 = vunpack.c.l.b16 %v1587
    %v1626 = vunpack.c.l.b16 %v1588
    %v1627 = vunpack.c.l.b16 %v1589
    %v1628 = vunpack.c.l.b16 %v1590
    %v1629 = vunpack.c.l.b16 %v1591
    %v1630 = vunpack.c.l.b16 %v1592
    %v1631 = vunpack.c.l.b16 %v1593
    %v1632 = vunpack.c.l.b16 %v1594
    %v1633 = vpack.c.b16 %v1618, %v1617
    %v1634 = vpack.c.b16 %v1620, %v1619
    %v1635 = vpack.c.b16 %v1622, %v1621
    %v1636 = vpack.c.b16 %v1624, %v1623
    %v1637 = vpack.c.b16 %v1626, %v1625
    %v1638 = vpack.c.b16 %v1628, %v1627
    %v1639 = vpack.c.b16 %v1630, %v1629
    %v1640 = vpack.c.b16 %v1632, %v1631
    %v1647 = vunpack.c.l.b16 %v1595
    %v1648 = vunpack.c.h.b16 %v1595
    %v1649 = vunpack.c.l.b16 %v1596
    %v1650 = vunpack.c.h.b16 %v1596
    %v1651 = vunpack.c.l.b16 %v1597
    %v1652 = vunpack.c.h.b16 %v1597
    %v1653 = vunpack.c.l.b16 %v1598
    %v1654 = vunpack.c.h.b16 %v1598
    %v1655 = vunpack.c.l.b16 %v1599
    %v1656 = vunpack.c.h.b16 %v1599
    %v1657 = vunpack.c.l.b16 %v1600
    %v1658 = vunpack.c.h.b16 %v1600
    %v1659 = vpack.c.b16 %v1651, %v1647
    %v1660 = vpack.c.b16 %v1652, %v1648
    %v1661 = vpack.c.b16 %v1653, %v1649
    %v1662 = vpack.c.b16 %v1654, %v1650
    %v1663 = vpack.c.b16 %v1655, %v1655
    %v1664 = vpack.c.b16 %v1656, %v1656
    %v1665 = vpack.c.b16 %v1657, %v1657
    %v1666 = vpack.c.b16 %v1658, %v1658
    %vm1671 = vcmask 195584
    %v1673 = vsel %vm1671, %v1633, 0
    %v1676 = vsel %vm1671, %v1634, 0
    %v1679 = vsel %vm1671, %v1635, 0
    %v1682 = vsel %vm1671, %v1636, 0
    %v1685 = vsel %vm1671, %v1637, 0
    %v1688 = vsel %vm1671, %v1638, 0
    %v1691 = vsel %vm1671, %v1639, 0
    %v1694 = vsel %vm1671, %v1640, 0
    %vm1696 = vcmask 1043456
    %v1698 = vsel %vm1696, %v1663, 0
    %v1701 = vsel %vm1696, %v1664, 0
    %v1704 = vsel %vm1696, %v1665, 0
    %v1707 = vsel %vm1696, %v1666, 0
    %1709 = vmatprep.subr.bf16.mxu0 0
    %1710 = vmatpush1.bf16.msra.mxu0 0
    %1711 = vmatprep.subr.bf16.mxu0 0
    %1712 = vmatpush1.bf16.msra.mxu0 0
    %1713 = vmatprep.subr.bf16.mxu0 0
    %1714 = vmatpush1.bf16.msra.mxu0 0
    %1715 = vmatprep.subr.bf16.mxu0 0
    %1716 = vmatpush1.bf16.msra.mxu0 0
    %1717 = vmatprep.subr.bf16.mxu0 0
    %1718 = vmatpush1.bf16.msra.mxu0 0
    %1719 = vmatprep.subr.bf16.mxu0 0
    %1720 = vmatpush1.bf16.msra.mxu0 0
    %1721 = vmatprep.subr.bf16.mxu0 %v1701
    %1722 = vmatpush1.bf16.msra.mxu0 %v1698
    %1723 = vmatprep.subr.bf16.mxu0 %v1660
    %1724 = vmatpush1.bf16.msra.mxu0 %v1659
    %1725 = vmatprep.subr.bf16.mxu0 0
    %1726 = vmatpush2.bf16.msra.mxu0 0
    %1727 = vmatprep.subr.bf16.mxu0 0
    %1728 = vmatpush2.bf16.msra.mxu0 0
    %1729 = vmatprep.subr.bf16.mxu0 0
    %1730 = vmatpush2.bf16.msra.mxu0 0
    %1731 = vmatprep.subr.bf16.mxu0 0
    %1732 = vmatpush2.bf16.msra.mxu0 0
    %1733 = vmatprep.subr.bf16.mxu0 0
    %1734 = vmatpush2.bf16.msra.mxu0 0
    %1735 = vmatprep.subr.bf16.mxu0 0
    %1736 = vmatpush2.bf16.msra.mxu0 0
    %1737 = vmatprep.subr.bf16.mxu0 0
    %1738 = vmatpush2.bf16.msra.mxu0 0
    %1739 = vmatprep.subr.bf16.mxu0 0
    %1740 = vmatpush2.bf16.msra.mxu0 0
    %1741 = vmatprep.mubr.bf16.mxu0 0
    %1742 = vmatmul.mubr.bf16.gmra.mxu0 %v1673
    %v1743 = vpop.f32.mrf.mxu0
    %v1744 = vadd.f32 0.0, %v1743
    %v1745 = vpop.f32.mrf.mxu0
    %v1746 = vadd.f32 0.0, %v1745
    %v1747 = vpop.f32.mrf.mxu0
    %v1748 = vadd.f32 0.0, %v1747
    %v1749 = vpop.f32.mrf.mxu0
    %v1750 = vadd.f32 0.0, %v1749
    %1751 = vmatprep.mubr.bf16.mxu0 0
    %1752 = vmatmul.mubr.bf16.gmra.mxu0 %v1676
    %v1753 = vpop.f32.mrf.mxu0
    %v1754 = vadd.f32 0.0, %v1753
    %v1755 = vpop.f32.mrf.mxu0
    %v1756 = vadd.f32 0.0, %v1755
    %v1757 = vpop.f32.mrf.mxu0
    %v1758 = vadd.f32 0.0, %v1757
    %v1759 = vpop.f32.mrf.mxu0
    %v1760 = vadd.f32 0.0, %v1759
    %1761 = vmatprep.mubr.bf16.mxu0 0
    %1762 = vmatmul.mubr.bf16.gmra.mxu0 %v1679
    %v1763 = vpop.f32.mrf.mxu0
    %v1764 = vadd.f32 0.0, %v1763
    %v1765 = vpop.f32.mrf.mxu0
    %v1766 = vadd.f32 0.0, %v1765
    %v1767 = vpop.f32.mrf.mxu0
    %v1768 = vadd.f32 0.0, %v1767
    %v1769 = vpop.f32.mrf.mxu0
    %v1770 = vadd.f32 0.0, %v1769
    %1771 = vmatprep.mubr.bf16.mxu0 0
    %1772 = vmatmul.mubr.bf16.gmra.mxu0 %v1682
    %v1773 = vpop.f32.mrf.mxu0
    %v1774 = vadd.f32 0.0, %v1773
    %v1775 = vpop.f32.mrf.mxu0
    %v1776 = vadd.f32 0.0, %v1775
    %v1777 = vpop.f32.mrf.mxu0
    %v1778 = vadd.f32 0.0, %v1777
    %v1779 = vpop.f32.mrf.mxu0
    %v1780 = vadd.f32 0.0, %v1779
    %1781 = vmatprep.mubr.bf16.mxu0 0
    %1782 = vmatmul.mubr.bf16.gmra.mxu0 %v1685
    %v1783 = vpop.f32.mrf.mxu0
    %v1784 = vadd.f32 0.0, %v1783
    %v1785 = vpop.f32.mrf.mxu0
    %v1786 = vadd.f32 0.0, %v1785
    %v1787 = vpop.f32.mrf.mxu0
    %v1788 = vadd.f32 0.0, %v1787
    %v1789 = vpop.f32.mrf.mxu0
    %v1790 = vadd.f32 0.0, %v1789
    %1791 = vmatprep.mubr.bf16.mxu0 0
    %1792 = vmatmul.mubr.bf16.gmra.mxu0 %v1688
    %v1793 = vpop.f32.mrf.mxu0
    %v1794 = vadd.f32 0.0, %v1793
    %v1795 = vpop.f32.mrf.mxu0
    %v1796 = vadd.f32 0.0, %v1795
    %v1797 = vpop.f32.mrf.mxu0
    %v1798 = vadd.f32 0.0, %v1797
    %v1799 = vpop.f32.mrf.mxu0
    %v1800 = vadd.f32 0.0, %v1799
    %1801 = vmatprep.mubr.bf16.mxu0 0
    %1802 = vmatmul.mubr.bf16.gmra.mxu0 %v1691
    %v1803 = vpop.f32.mrf.mxu0
    %v1804 = vpop.f32.mrf.mxu0
    %v1805 = vpop.f32.mrf.mxu0
    %v1806 = vpop.f32.mrf.mxu0
    %1807 = vmatprep.mubr.bf16.mxu0 0
    %1808 = vmatmul.mubr.bf16.gmra.mxu0 %v1694
    %v1809 = vpop.f32.mrf.mxu0
    %v1810 = vpop.f32.mrf.mxu0
    %v1811 = vpop.f32.mrf.mxu0
    %v1812 = vpop.f32.mrf.mxu0
    %1813 = vdwg.mxu0
    %1814 = vmatprep.subr.bf16.mxu0 0
    %1815 = vmatpush1.bf16.msra.mxu0 0
    %1816 = vmatprep.subr.bf16.mxu0 0
    %1817 = vmatpush1.bf16.msra.mxu0 0
    %1818 = vmatprep.subr.bf16.mxu0 0
    %1819 = vmatpush1.bf16.msra.mxu0 0
    %1820 = vmatprep.subr.bf16.mxu0 0
    %1821 = vmatpush1.bf16.msra.mxu0 0
    %1822 = vmatprep.subr.bf16.mxu0 0
    %1823 = vmatpush1.bf16.msra.mxu0 0
    %1824 = vmatprep.subr.bf16.mxu0 0
    %1825 = vmatpush1.bf16.msra.mxu0 0
    %1826 = vmatprep.subr.bf16.mxu0 %v1707
    %1827 = vmatpush1.bf16.msra.mxu0 %v1704
    %1828 = vmatprep.subr.bf16.mxu0 %v1662
    %1829 = vmatpush1.bf16.msra.mxu0 %v1661
    %1830 = vmatprep.subr.bf16.mxu0 0
    %1831 = vmatpush2.bf16.msra.mxu0 0
    %1832 = vmatprep.subr.bf16.mxu0 0
    %1833 = vmatpush2.bf16.msra.mxu0 0
    %1834 = vmatprep.subr.bf16.mxu0 0
    %1835 = vmatpush2.bf16.msra.mxu0 0
    %1836 = vmatprep.subr.bf16.mxu0 0
    %1837 = vmatpush2.bf16.msra.mxu0 0
    %1838 = vmatprep.subr.bf16.mxu0 0
    %1839 = vmatpush2.bf16.msra.mxu0 0
    %1840 = vmatprep.subr.bf16.mxu0 0
    %1841 = vmatpush2.bf16.msra.mxu0 0
    %1842 = vmatprep.subr.bf16.mxu0 0
    %1843 = vmatpush2.bf16.msra.mxu0 0
    %1844 = vmatprep.subr.bf16.mxu0 0
    %1845 = vmatpush2.bf16.msra.mxu0 0
    %1846 = vmatprep.mubr.bf16.mxu0 0
    %1847 = vmatmul.mubr.bf16.gmra.mxu0 %v1673
    %v1848 = vpop.f32.mrf.mxu0
    %v1849 = vadd.f32 0.0, %v1848
    %v1850 = vpop.f32.mrf.mxu0
    %v1851 = vadd.f32 0.0, %v1850
    %v1852 = vpop.f32.mrf.mxu0
    %v1853 = vadd.f32 0.0, %v1852
    %v1854 = vpop.f32.mrf.mxu0
    %v1855 = vadd.f32 0.0, %v1854
    %1856 = vmatprep.mubr.bf16.mxu0 0
    %1857 = vmatmul.mubr.bf16.gmra.mxu0 %v1676
    %v1858 = vpop.f32.mrf.mxu0
    %v1859 = vadd.f32 0.0, %v1858
    %v1860 = vpop.f32.mrf.mxu0
    %v1861 = vadd.f32 0.0, %v1860
    %v1862 = vpop.f32.mrf.mxu0
    %v1863 = vadd.f32 0.0, %v1862
    %v1864 = vpop.f32.mrf.mxu0
    %v1865 = vadd.f32 0.0, %v1864
    %1866 = vmatprep.mubr.bf16.mxu0 0
    %1867 = vmatmul.mubr.bf16.gmra.mxu0 %v1679
    %v1868 = vpop.f32.mrf.mxu0
    %v1869 = vadd.f32 0.0, %v1868
    %v1870 = vpop.f32.mrf.mxu0
    %v1871 = vadd.f32 0.0, %v1870
    %v1872 = vpop.f32.mrf.mxu0
    %v1873 = vadd.f32 0.0, %v1872
    %v1874 = vpop.f32.mrf.mxu0
    %v1875 = vadd.f32 0.0, %v1874
    %1876 = vmatprep.mubr.bf16.mxu0 0
    %1877 = vmatmul.mubr.bf16.gmra.mxu0 %v1682
    %v1878 = vpop.f32.mrf.mxu0
    %v1879 = vadd.f32 0.0, %v1878
    %v1880 = vpop.f32.mrf.mxu0
    %v1881 = vadd.f32 0.0, %v1880
    %v1882 = vpop.f32.mrf.mxu0
    %v1883 = vadd.f32 0.0, %v1882
    %v1884 = vpop.f32.mrf.mxu0
    %v1885 = vadd.f32 0.0, %v1884
    %1886 = vmatprep.mubr.bf16.mxu0 0
    %1887 = vmatmul.mubr.bf16.gmra.mxu0 %v1685
    %v1888 = vpop.f32.mrf.mxu0
    %v1889 = vadd.f32 0.0, %v1888
    %v1890 = vpop.f32.mrf.mxu0
    %v1891 = vadd.f32 0.0, %v1890
    %v1892 = vpop.f32.mrf.mxu0
    %v1893 = vadd.f32 0.0, %v1892
    %v1894 = vpop.f32.mrf.mxu0
    %v1895 = vadd.f32 0.0, %v1894
    %1896 = vmatprep.mubr.bf16.mxu0 0
    %1897 = vmatmul.mubr.bf16.gmra.mxu0 %v1688
    %v1898 = vpop.f32.mrf.mxu0
    %v1899 = vadd.f32 0.0, %v1898
    %v1900 = vpop.f32.mrf.mxu0
    %v1901 = vadd.f32 0.0, %v1900
    %v1902 = vpop.f32.mrf.mxu0
    %v1903 = vadd.f32 0.0, %v1902
    %v1904 = vpop.f32.mrf.mxu0
    %v1905 = vadd.f32 0.0, %v1904
    %1906 = vmatprep.mubr.bf16.mxu0 0
    %1907 = vmatmul.mubr.bf16.gmra.mxu0 %v1691
    %v1908 = vpop.f32.mrf.mxu0
    %v1909 = vpop.f32.mrf.mxu0
    %v1910 = vpop.f32.mrf.mxu0
    %v1911 = vpop.f32.mrf.mxu0
    %1912 = vmatprep.mubr.bf16.mxu0 0
    %1913 = vmatmul.mubr.bf16.gmra.mxu0 %v1694
    %v1914 = vpop.f32.mrf.mxu0
    %v1915 = vpop.f32.mrf.mxu0
    %v1916 = vpop.f32.mrf.mxu0
    %v1917 = vpop.f32.mrf.mxu0
    %1918 = vdwg.mxu0
    %v1919 = vmul.f32 %v1744, %v1567
    %v1920 = vmul.f32 %v1746, %v1568
    %v1921 = vmul.f32 %v1849, %v1569
    %v1922 = vmul.f32 %v1851, %v1570
    %v1923 = vmul.f32 %v1748, %v1571
    %v1924 = vmul.f32 %v1750, %v1572
    %v1925 = vmul.f32 %v1853, %v1573
    %v1926 = vmul.f32 %v1855, %v1574
    %v1927 = vadd.f32 %v1919, %v1923
    %v1928 = vadd.f32 %v1920, %v1924
    %v1929 = vadd.f32 %v1921, %v1925
    %v1930 = vadd.f32 %v1922, %v1926
    %v1931 = vmul.f32 %v1754, %v1575
    %v1932 = vmul.f32 %v1756, %v1576
    %v1933 = vmul.f32 %v1859, %v1577
    %v1934 = vmul.f32 %v1861, %v1578
    %v1935 = vadd.f32 %v1927, %v1931
    %v1936 = vadd.f32 %v1928, %v1932
    %v1937 = vadd.f32 %v1929, %v1933
    %v1938 = vadd.f32 %v1930, %v1934
    %v1939 = vadd.f32 %v1935, %v1758
    %v1940 = vadd.f32 %v1936, %v1760
    %v1941 = vadd.f32 %v1937, %v1863
    %v1942 = vadd.f32 %v1938, %v1865
    %v1943 = vmul.f32 %v1764, %v1567
    %v1944 = vmul.f32 %v1766, %v1568
    %v1945 = vmul.f32 %v1869, %v1569
    %v1946 = vmul.f32 %v1871, %v1570
    %v1947 = vmul.f32 %v1768, %v1571
    %v1948 = vmul.f32 %v1770, %v1572
    %v1949 = vmul.f32 %v1873, %v1573
    %v1950 = vmul.f32 %v1875, %v1574
    %v1951 = vadd.f32 %v1943, %v1947
    %v1952 = vadd.f32 %v1944, %v1948
    %v1953 = vadd.f32 %v1945, %v1949
    %v1954 = vadd.f32 %v1946, %v1950
    %v1955 = vmul.f32 %v1774, %v1575
    %v1956 = vmul.f32 %v1776, %v1576
    %v1957 = vmul.f32 %v1879, %v1577
    %v1958 = vmul.f32 %v1881, %v1578
    %v1959 = vadd.f32 %v1951, %v1955
    %v1960 = vadd.f32 %v1952, %v1956
    %v1961 = vadd.f32 %v1953, %v1957
    %v1962 = vadd.f32 %v1954, %v1958
    %v1963 = vadd.f32 %v1959, %v1778
    %v1964 = vadd.f32 %v1960, %v1780
    %v1965 = vadd.f32 %v1961, %v1883
    %v1966 = vadd.f32 %v1962, %v1885
    %v1967 = vmul.f32 %v1784, %v1567
    %v1968 = vmul.f32 %v1786, %v1568
    %v1969 = vmul.f32 %v1889, %v1569
    %v1970 = vmul.f32 %v1891, %v1570
    %v1971 = vmul.f32 %v1788, %v1571
    %v1972 = vmul.f32 %v1790, %v1572
    %v1973 = vmul.f32 %v1893, %v1573
    %v1974 = vmul.f32 %v1895, %v1574
    %v1975 = vadd.f32 %v1967, %v1971
    %v1976 = vadd.f32 %v1968, %v1972
    %v1977 = vadd.f32 %v1969, %v1973
    %v1978 = vadd.f32 %v1970, %v1974
    %v1979 = vmul.f32 %v1794, %v1575
    %v1980 = vmul.f32 %v1796, %v1576
    %v1981 = vmul.f32 %v1899, %v1577
    %v1982 = vmul.f32 %v1901, %v1578
    %v1983 = vadd.f32 %v1975, %v1979
    %v1984 = vadd.f32 %v1976, %v1980
    %v1985 = vadd.f32 %v1977, %v1981
    %v1986 = vadd.f32 %v1978, %v1982
    %v1987 = vadd.f32 %v1983, %v1798
    %v1988 = vadd.f32 %v1984, %v1800
    %v1989 = vadd.f32 %v1985, %v1903
    %v1990 = vadd.f32 %v1986, %v1905
    %v1991 = vld [vmem:[%s6] sm:$0xff]
    %1993 = vset.pattern.permute.xlu0 0
    %1994 = vperm.xlu0 %1993, %v1991
    %v1995 = vpop.permute.xlu0 %1994
    %v1997 = vmul.f32 %v1939, %v1995
    %v1998 = vmul.f32 %v1940, %v1995
    %v1999 = vmul.f32 %v1941, %v1995
    %v2000 = vmul.f32 %v1942, %v1995
    %2001 = vset.pattern.permute.xlu0 1
    %2002 = vperm.xlu0 %2001, %v1991
    %v2003 = vpop.permute.xlu0 %2002
    %v2005 = vadd.f32 %v1997, %v2003
    %v2006 = vadd.f32 %v1998, %v2003
    %v2007 = vadd.f32 %v1999, %v2003
    %v2008 = vadd.f32 %v2000, %v2003
    %2009 = vst [vmem:[#allocation11] sm:$0xff] %v2005
    %2010 = vst [vmem:[#allocation11 + $0x8] sm:$0xff] %v2006
    %2011 = vst [vmem:[#allocation11 + $0x10] sm:$0xff] %v2007
    %2012 = vst [vmem:[#allocation11 + $0x18] sm:$0xff] %v2008
    %v2013 = vmul.f32 %v1963, %v1995
    %v2014 = vmul.f32 %v1964, %v1995
    %v2015 = vmul.f32 %v1965, %v1995
    %v2016 = vmul.f32 %v1966, %v1995
    %2017 = vset.pattern.permute.xlu0 2
    %2018 = vperm.xlu0 %2017, %v1991
    %v2019 = vpop.permute.xlu0 %2018
    %v2021 = vadd.f32 %v2013, %v2019
    %v2022 = vadd.f32 %v2014, %v2019
    %v2023 = vadd.f32 %v2015, %v2019
    %v2024 = vadd.f32 %v2016, %v2019
    %s2025 = scalar_lea.vmem [#allocation11], 32
    %2026 = vst [vmem:[%s2025] sm:$0xff] %v2021
    %2027 = vst [vmem:[%s2025 + $0x8] sm:$0xff] %v2022
    %2028 = vst [vmem:[%s2025 + $0x10] sm:$0xff] %v2023
    %2029 = vst [vmem:[%s2025 + $0x18] sm:$0xff] %v2024
    %v2030 = vmul.f32 %v1987, %v1995
    %v2031 = vmul.f32 %v1988, %v1995
    %v2032 = vmul.f32 %v1989, %v1995
    %v2033 = vmul.f32 %v1990, %v1995
    %2034 = vset.pattern.permute.xlu0 3
    %2035 = vperm.xlu0 %2034, %v1991
    %v2036 = vpop.permute.xlu0 %2035
    %v2038 = vadd.f32 %v2030, %v2036
    %v2039 = vadd.f32 %v2031, %v2036
    %v2040 = vadd.f32 %v2032, %v2036
    %v2041 = vadd.f32 %v2033, %v2036
    %s2042 = scalar_lea.vmem [#allocation11], 64
    %2043 = vst [vmem:[%s2042] sm:$0xff] %v2038
    %2044 = vst [vmem:[%s2042 + $0x8] sm:$0xff] %v2039
    %2045 = vst [vmem:[%s2042 + $0x10] sm:$0xff] %v2040
    %2046 = vst [vmem:[%s2042 + $0x18] sm:$0xff] %v2041
    %v2047 = vpack.c.bf16 %v1963, %v1939
    %v2048 = vpack.c.bf16 %v1964, %v1940
    %v2049 = vpack.c.bf16 %v1965, %v1941
    %v2050 = vpack.c.bf16 %v1966, %v1942
    %v2051 = vpack.c.bf16 %v1987, %v1987
    %v2052 = vpack.c.bf16 %v1988, %v1988
    %v2053 = vpack.c.bf16 %v1989, %v1989
    %v2054 = vpack.c.bf16 %v1990, %v1990
    %v2055 = vld [vmem:[#allocation7] sm:$0xff]
    %v2056 = vld [vmem:[#allocation7 + $0x8] sm:$0xff]
    %v2057 = vld [vmem:[#allocation7 + $0x10] sm:$0xff]
    %v2058 = vld [vmem:[#allocation7 + $0x18] sm:$0xff]
    %v2059 = vld [vmem:[#allocation7 + $0x20] sm:$0xff]
    %v2060 = vld [vmem:[#allocation7 + $0x28] sm:$0xff]
    %v2061 = vld [vmem:[#allocation7 + $0x30] sm:$0x11]
    %v2062 = vld [vmem:[#allocation7 + $0x38] sm:$0x11]
    %v2071 = vunpack.c.l.b16 %v2055
    %v2072 = vunpack.c.h.b16 %v2055
    %v2073 = vunpack.c.l.b16 %v2056
    %v2074 = vunpack.c.h.b16 %v2056
    %v2075 = vunpack.c.l.b16 %v2057
    %v2076 = vunpack.c.h.b16 %v2057
    %v2077 = vunpack.c.l.b16 %v2058
    %v2078 = vunpack.c.h.b16 %v2058
    %v2079 = vunpack.c.l.b16 %v2059
    %v2080 = vunpack.c.h.b16 %v2059
    %v2081 = vunpack.c.l.b16 %v2060
    %v2082 = vunpack.c.h.b16 %v2060
    %v2083 = vunpack.c.l.b16 %v2061
    %v2084 = vunpack.c.h.b16 %v2061
    %v2085 = vunpack.c.l.b16 %v2062
    %v2086 = vunpack.c.h.b16 %v2062
    %v2087 = vpack.c.b16 %v2075, %v2071
    %v2088 = vpack.c.b16 %v2076, %v2072
    %v2089 = vpack.c.b16 %v2077, %v2073
    %v2090 = vpack.c.b16 %v2078, %v2074
    %v2091 = vpack.c.b16 %v2083, %v2079
    %v2092 = vpack.c.b16 %v2084, %v2080
    %v2093 = vpack.c.b16 %v2085, %v2081
    %v2094 = vpack.c.b16 %v2086, %v2082
    %2103 = vmatprep.subr.bf16.mxu0 0
    %2104 = vmatpush1.bf16.xpose.msra.mxu0 0
    %2105 = vmatprep.subr.bf16.mxu0 0
    %2106 = vmatpush1.bf16.xpose.msra.mxu0 0
    %2107 = vmatprep.subr.bf16.mxu0 0
    %2108 = vmatpush1.bf16.xpose.msra.mxu0 0
    %2109 = vmatprep.subr.bf16.mxu0 0
    %2110 = vmatpush1.bf16.xpose.msra.mxu0 0
    %2111 = vmatprep.subr.bf16.mxu0 0
    %2112 = vmatpush1.bf16.xpose.msra.mxu0 0
    %2113 = vmatprep.subr.bf16.mxu0 0
    %2114 = vmatpush1.bf16.xpose.msra.mxu0 0
    %2115 = vmatprep.subr.bf16.mxu0 %v2092
    %2116 = vmatpush1.bf16.xpose.msra.mxu0 %v2091
    %2117 = vmatprep.subr.bf16.mxu0 %v2088
    %2118 = vmatpush1.bf16.xpose.msra.mxu0 %v2087
    %2119 = vmatprep.subr.bf16.mxu0 0
    %2120 = vmatpush2.bf16.xpose.msra.mxu0 0
    %2121 = vmatprep.subr.bf16.mxu0 0
    %2122 = vmatpush2.bf16.xpose.msra.mxu0 0
    %2123 = vmatprep.subr.bf16.mxu0 0
    %2124 = vmatpush2.bf16.xpose.msra.mxu0 0
    %2125 = vmatprep.subr.bf16.mxu0 0
    %2126 = vmatpush2.bf16.xpose.msra.mxu0 0
    %2127 = vmatprep.subr.bf16.mxu0 0
    %2128 = vmatpush2.bf16.xpose.msra.mxu0 0
    %2129 = vmatprep.subr.bf16.mxu0 0
    %2130 = vmatpush2.bf16.xpose.msra.mxu0 0
    %2131 = vmatprep.subr.bf16.mxu0 0
    %2132 = vmatpush2.bf16.xpose.msra.mxu0 0
    %2133 = vmatprep.subr.bf16.mxu0 0
    %2134 = vmatpush2.bf16.xpose.msra.mxu0 0
    %2135 = vmatprep.mubr.bf16.mxu0 %v2048
    %2136 = vmatmul.mubr.bf16.gmra.mxu0 %v2047
    %v2137 = vpop.f32.mrf.mxu0
    %v2138 = vadd.f32 0.0, %v2137
    %v2139 = vpop.f32.mrf.mxu0
    %v2140 = vpop.f32.mrf.mxu0
    %v2141 = vadd.f32 0.0, %v2140
    %v2142 = vpop.f32.mrf.mxu0
    %2143 = vmatprep.mubr.bf16.mxu0 %v2052
    %2144 = vmatmul.mubr.bf16.gmra.mxu0 %v2051
    %v2145 = vpop.f32.mrf.mxu0
    %v2146 = vadd.f32 0.0, %v2145
    %v2147 = vpop.f32.mrf.mxu0
    %v2148 = vpop.f32.mrf.mxu0
    %v2149 = vpop.f32.mrf.mxu0
    %2150 = vdwg.mxu0
    %2151 = vmatprep.subr.bf16.mxu0 0
    %2152 = vmatpush1.bf16.xpose.msra.mxu0 0
    %2153 = vmatprep.subr.bf16.mxu0 0
    %2154 = vmatpush1.bf16.xpose.msra.mxu0 0
    %2155 = vmatprep.subr.bf16.mxu0 0
    %2156 = vmatpush1.bf16.xpose.msra.mxu0 0
    %2157 = vmatprep.subr.bf16.mxu0 0
    %2158 = vmatpush1.bf16.xpose.msra.mxu0 0
    %2159 = vmatprep.subr.bf16.mxu0 0
    %2160 = vmatpush1.bf16.xpose.msra.mxu0 0
    %2161 = vmatprep.subr.bf16.mxu0 0
    %2162 = vmatpush1.bf16.xpose.msra.mxu0 0
    %2163 = vmatprep.subr.bf16.mxu0 %v2094
    %2164 = vmatpush1.bf16.xpose.msra.mxu0 %v2093
    %2165 = vmatprep.subr.bf16.mxu0 %v2090
    %2166 = vmatpush1.bf16.xpose.msra.mxu0 %v2089
    %2167 = vmatprep.subr.bf16.mxu0 0
    %2168 = vmatpush2.bf16.xpose.msra.mxu0 0
    %2169 = vmatprep.subr.bf16.mxu0 0
    %2170 = vmatpush2.bf16.xpose.msra.mxu0 0
    %2171 = vmatprep.subr.bf16.mxu0 0
    %2172 = vmatpush2.bf16.xpose.msra.mxu0 0
    %2173 = vmatprep.subr.bf16.mxu0 0
    %2174 = vmatpush2.bf16.xpose.msra.mxu0 0
    %2175 = vmatprep.subr.bf16.mxu0 0
    %2176 = vmatpush2.bf16.xpose.msra.mxu0 0
    %2177 = vmatprep.subr.bf16.mxu0 0
    %2178 = vmatpush2.bf16.xpose.msra.mxu0 0
    %2179 = vmatprep.subr.bf16.mxu0 0
    %2180 = vmatpush2.bf16.xpose.msra.mxu0 0
    %2181 = vmatprep.subr.bf16.mxu0 0
    %2182 = vmatpush2.bf16.xpose.msra.mxu0 0
    %2183 = vmatprep.mubr.bf16.mxu0 %v2050
    %2184 = vmatmul.mubr.bf16.gmra.mxu0 %v2049
    %v2185 = vpop.f32.mrf.mxu0
    %v2186 = vadd.f32 %v2138, %v2185
    %v2187 = vpop.f32.mrf.mxu0
    %v2188 = vpop.f32.mrf.mxu0
    %v2189 = vadd.f32 %v2141, %v2188
    %v2190 = vpop.f32.mrf.mxu0
    %2191 = vmatprep.mubr.bf16.mxu0 %v2054
    %2192 = vmatmul.mubr.bf16.gmra.mxu0 %v2053
    %v2193 = vpop.f32.mrf.mxu0
    %v2194 = vadd.f32 %v2146, %v2193
    %v2195 = vpop.f32.mrf.mxu0
    %v2196 = vpop.f32.mrf.mxu0
    %v2197 = vpop.f32.mrf.mxu0
    %2198 = vdwg.mxu0
    %v2199 = vmul.f32 %v2186, %v1995
    %v2200 = vadd.f32 %v2199, %v2003
    %vm2201 = vcmask 203776
    %2202 = vst.msk [vmem:[#allocation12] sm:$0xff] %vm2201, %v2200
    %v2203 = vmul.f32 %v2189, %v1995
    %v2204 = vadd.f32 %v2203, %v2019
    %s2205 = scalar_lea.vmem [#allocation12], 8
    %2206 = vst.msk [vmem:[%s2205] sm:$0xff] %vm2201, %v2204
    %v2207 = vmul.f32 %v2194, %v1995
    %v2208 = vadd.f32 %v2207, %v2036
    %s2209 = scalar_lea.vmem [#allocation12], 16
    %2210 = vst.msk [vmem:[%s2209] sm:$0xff] %vm2201, %v2208
    // Predicated region
    $region50: #{tpu_custom_call.1} parent=1 // pred_check
      _
    $region51: #{tpu_custom_call.1} parent=1 // pred_check_branch
      %2212 = sbr.rel (0) target = $region53
    $region52: #{tpu_custom_call.1} parent=1 // pred_region
      %s2214 = ssub.s32 1536, 1536
      %2215 = vsyncadd [#allocation4], %s2214
      %s2216 = sshll.u32 [#allocation11], 4
      %s2217 = int_to_ptr.vmem [resolvable:$true] %s2216
      %2222 = dma.vmem_to_hbm [thread:$0]  %s2217, 1536, %s7, [#allocation4], 512, 512, 32
    $region53: #{tpu_custom_call.1} parent=1 // pred_fallthru
      _
    // Predicated region
    $region54: #{tpu_custom_call.1} parent=1 // pred_check
      _
    $region55: #{tpu_custom_call.1} parent=1 // pred_check_branch
      %2224 = sbr.rel (0) target = $region57
    $region56: #{tpu_custom_call.1} parent=1 // pred_region
      %s2226 = ssub.s32 384, 384
      %2227 = vsyncadd [#allocation13], %s2226
      %s2228 = sshll.u32 [#allocation12], 4
      %s2229 = int_to_ptr.vmem [resolvable:$true] %s2228
      %2234 = dma.vmem_to_hbm [thread:$0]  %s2229, 384, %s8, [#allocation13], 128, 128, 8
    $region57: #{tpu_custom_call.1} parent=1 // pred_fallthru
      _
    // Predicated region
    $region58: #{tpu_custom_call.1} parent=1 // pred_check
      _
    $region59: #{tpu_custom_call.1} parent=1 // pred_check_branch
      %2236 = sbr.rel (0) target = $region61
    $region60: #{tpu_custom_call.1} parent=1 // pred_region
      %2237 = dma.done [#allocation4], 1536
    $region61: #{tpu_custom_call.1} parent=1 // pred_fallthru
      _
    // Predicated region
    $region62: #{tpu_custom_call.1} parent=1 // pred_check
      _
    $region63: #{tpu_custom_call.1} parent=1 // pred_check_branch
      %2239 = sbr.rel (0) target = $region65
    $region64: #{tpu_custom_call.1} parent=1 // pred_region
      %2240 = dma.done [#allocation13], 384
    $region65: #{tpu_custom_call.1} parent=1 // pred_fallthru
      _
    %2241 = vsyncpa [#allocation3], 1
    %2242 = vsyncpa [#allocation6], 1
    %2243 = vsyncpa [#allocation9], 1
    %2244 = vsyncpa [#allocation4], 1
    %2245 = vsyncpa [#allocation13], 1

</llo_original>
